<compile_context>
chip_gen: v6e
topology: v6e:2x2x1
jax: 0.10.0
libtpu: 0.0.40
codegen_flags: <defaults>
</compile_context>

<pallas_src>
import jax
import jax.numpy as jnp
import numpy as np
from jax.experimental import pallas as pl
from jax.experimental.pallas import tpu as pltpu

KSIZE = 7
PAD = KSIZE // 2  # padding='same' with stride 1 -> pad 3 on each side


def _make_kernel(TB, H, W):
    HW = H * W
    PADLEN = PAD * (W + 1)  # 3 zero rows (3*W) + 3 zero cols (3) folded into one flat pad

    def kernel(w_ref, mask_ref, x_ref, o_ref, run_max_ref):
        # w_ref       : SMEM (7, 7) f32             conv weight (scalar reads)
        # mask_ref    : VMEM (7, HW) f32            per-kj column-validity masks
        # x_ref       : VMEM (TB, TC, HW) x.dtype   streamed channel chunk
        # o_ref       : VMEM (TB, 1, HW) x.dtype    attention map (written on last chunk)
        # run_max_ref : VMEM (TB, HW) x.dtype       running channel max
        c = pl.program_id(1)

        @pl.when(c == 0)
        def _init():
            run_max_ref[...] = jnp.full_like(run_max_ref, -jnp.inf)

        # channel max of this chunk in the input dtype (exact; no full-block f32 cast)
        run_max_ref[...] = jnp.maximum(run_max_ref[...], jnp.max(x_ref[...], axis=1))

        @pl.when(c == pl.num_programs(1) - 1)
        def _finalize():
            plane = run_max_ref[...].astype(jnp.float32)            # (TB, HW)
            # flat zero pad covers the 3 rows above/below; columns are handled by masks
            padded = jnp.pad(plane, ((0, 0), (PADLEN, PADLEN)))     # (TB, HW + 6W + 6)
            acc = jnp.zeros((TB, HW), jnp.float32)
            for kj in range(KSIZE):                                 # 7 column offsets
                mask = mask_ref[kj:kj + 1, :]                       # (1, HW)
                for ki in range(KSIZE):                             # 7 row offsets
                    start = ki * W + kj                             # flat (ki, kj) shift
                    tap = padded[:, start:start + HW]
                    acc = acc + w_ref[ki, kj] * (tap * mask)
            # sigmoid(x) = 1 / (1 + exp(-x)); exp on EUP, exact reciprocal keeps 1e-5 accuracy
            att = pl.reciprocal(1.0 + jnp.exp(-acc), approx=False)
            for b in range(TB):
                o_ref[b] = att[b:b + 1, :].astype(o_ref.dtype)

    return kernel


def _pick_channel_tile(C, TB, HW, itemsize):
    # keep each input block under ~8 MiB -> <=16 MiB double-buffered, comfortably below the
    # default scoped VMEM limit on every generation (incl. v7x's smaller 64 MiB VMEM).
    budget = 8 * 1024 * 1024
    cap = max(1, budget // max(1, TB * HW * itemsize))
    if C <= cap:
        return C                                     # full channel dim: always a legal block
    mult8 = [t for t in range(8, C + 1, 8) if C % t == 0]   # keep second-minor dim 8-aligned
    under = [t for t in mult8 if t <= cap]
    if under:
        return max(under)
    if mult8:
        return min(mult8)                            # smallest aligned tile; slight overshoot
    return C                                         # pathological shape: fall back to full C


def spatial_attention(x, weight):
    """x: (B, C, H, W); weight: (1, 1, 7, 7) conv weight (no bias). Returns (B, 1, H, W)."""
    B, C, H, W = x.shape
    HW = H * W
    x_flat = x.reshape(B, C, HW)                     # free for contiguous NCHW
    w2d = weight.reshape(KSIZE, KSIZE).astype(jnp.float32)

    # per-kj column validity masks for the flat-domain conv (trace-time constants)
    col = np.arange(HW) % W
    masks = np.stack(
        [((col + (kj - PAD) >= 0) & (col + (kj - PAD) < W)).astype(np.float32)
         for kj in range(KSIZE)], axis=0)            # (7, HW)
    masks = jnp.asarray(masks)

    # batch tile: amortize per-step overhead but keep the parallel axis extent >= 2
    # so dual-TC chips (v7x) get work on both cores.
    tb_cap = min(8, max(1, B // 2))
    TB = max(t for t in range(1, tb_cap + 1) if B % t == 0)
    TC = _pick_channel_tile(C, TB, HW, jnp.dtype(x.dtype).itemsize)

    grid = (B // TB, C // TC)                        # (parallel batch, channel reduction)
    out = pl.pallas_call(
        _make_kernel(TB, H, W),
        out_shape=jax.ShapeDtypeStruct((B, 1, HW), x.dtype),
        grid=grid,
        in_specs=[
            pl.BlockSpec(memory_space=pltpu.MemorySpace.SMEM),      # 7x7 weight, whole array
            pl.BlockSpec((KSIZE, HW), lambda b, c: (0, 0)),         # column masks (resident)
            pl.BlockSpec((TB, TC, HW), lambda b, c: (b, c, 0)),     # streamed input chunk
        ],
        out_specs=pl.BlockSpec((TB, 1, HW), lambda b, c: (b, 0, 0)),
        scratch_shapes=[pltpu.VMEM((TB, HW), x.dtype)],             # running channel max
        compiler_params=pltpu.CompilerParams(
            dimension_semantics=("parallel", "arbitrary")),
    )(w2d, masks, x_flat)
    return out.reshape(B, 1, H, W)


def ref_spatial_attention(x, weight):
    """Pure-JAX reference mirroring the PyTorch forward."""
    max_out = jnp.max(x, axis=1, keepdims=True)                     # (B,1,H,W)
    y = jax.lax.conv_general_dilated(
        max_out, weight.astype(jnp.float32),
        window_strides=(1, 1), padding="SAME",
        dimension_numbers=("NCHW", "OIHW", "NCHW"))
    return jax.nn.sigmoid(y)


if __name__ == "__main__":
    key = jax.random.PRNGKey(0)
    kx, kw = jax.random.split(key)

    B, C, H, W = 2, 4, 16, 16
    x = jax.random.normal(kx, (B, C, H, W), dtype=jnp.float32)

    # Deterministic conv weight init (Conv2d(1, 1, 7, bias=False) -> weight shape (1,1,7,7)).
    fan_in = 1 * KSIZE * KSIZE
    bound = 1.0 / (fan_in ** 0.5)
    weight = jax.random.uniform(kw, (1, 1, KSIZE, KSIZE),
                                minval=-bound, maxval=bound, dtype=jnp.float32)

    out = jax.block_until_ready(spatial_attention(x, weight))
    ref = jax.block_until_ready(ref_spatial_attention(x, weight))

    assert out.shape == (B, 1, H, W)
    assert jnp.allclose(out, ref, atol=1e-5, rtol=1e-5), "mismatch vs JAX reference"

    print("KERNEL_OK")
</pallas_src>

<mosaic_0001>
module attributes {stable_mosaic.version = 11 : i64} {
  func.func @kernel(%arg0: i32, %arg1: i32, %arg2: memref<7x7xf32, #tpu.memory_space<smem>>, %arg3: memref<7x256xf32, #tpu.memory_space<vmem>>, %arg4: memref<1x4x256xf32, #tpu.memory_space<vmem>>, %arg5: memref<1x1x256xf32, #tpu.memory_space<vmem>>, %arg6: memref<1x256xf32, #tpu.memory_space<vmem>>) attributes {dimension_semantics = [#tpu.dimension_semantics<parallel>, #tpu.dimension_semantics<arbitrary>], iteration_bounds = array<i64: 2, 1>, scalar_prefetch = 0 : i64, scratch_operands = 1 : i64, tpu.core_type = #tpu.core_type<tc>, window_params = [{transform_indices = @transform_0, window_bounds = array<i64: 7, 7>}, {pipeline_mode = #tpu.pipeline_mode<synchronous>, transform_indices = @transform_1, window_bounds = array<i64: 7, 256>}, {transform_indices = @transform_2, window_bounds = array<i64: 1, 4, 256>}, {transform_indices = @transform_3, window_bounds = array<i64: 1, 1, 256>}]} {
    %c0_i32 = arith.constant 0 : i32
    %0 = arith.cmpi eq, %arg1, %c0_i32 : i32
    %1 = arith.extui %0 : i1 to i32
    %c0_i32_0 = arith.constant 0 : i32
    %2 = arith.cmpi ne, %1, %c0_i32_0 : i32
    scf.if %2 {
      %cst_9 = arith.constant 0xFF800000 : f32
      %11 = vector.broadcast %cst_9 : f32 to vector<1x256xf32>
      %c0_10 = arith.constant 0 : index
      %c0_11 = arith.constant 0 : index
      %12 = vector.load %arg6[%c0_10, %c0_11] : memref<1x256xf32, #tpu.memory_space<vmem>>, vector<1x256xf32>
      tpu.vector_store %arg6[%c0_10, %c0_11], %11 {strides = array<i32>} : memref<1x256xf32, #tpu.memory_space<vmem>>, vector<1x256xf32>,
    } else {
    }
    %c0 = arith.constant 0 : index
    %c0_1 = arith.constant 0 : index
    %3 = vector.load %arg6[%c0, %c0_1] : memref<1x256xf32, #tpu.memory_space<vmem>>, vector<1x256xf32>
    %c0_2 = arith.constant 0 : index
    %c0_3 = arith.constant 0 : index
    %c0_4 = arith.constant 0 : index
    %4 = vector.load %arg4[%c0_2, %c0_3, %c0_4] : memref<1x4x256xf32, #tpu.memory_space<vmem>>, vector<1x4x256xf32>
    %cst = arith.constant dense<0xFF800000> : vector<1x256xf32>
    %5 = vector.multi_reduction <maximumf>, %4, %cst [1] : vector<1x4x256xf32> to vector<1x256xf32>
    %6 = arith.maximumf %3, %5 : vector<1x256xf32>
    %c0_5 = arith.constant 0 : index
    %c0_6 = arith.constant 0 : index
    %7 = vector.load %arg6[%c0_5, %c0_6] : memref<1x256xf32, #tpu.memory_space<vmem>>, vector<1x256xf32>
    tpu.vector_store %arg6[%c0_5, %c0_6], %6 {strides = array<i32>} : memref<1x256xf32, #tpu.memory_space<vmem>>, vector<1x256xf32>,
    %c0_i32_7 = arith.constant 0 : i32
    %8 = arith.cmpi eq, %arg1, %c0_i32_7 : i32
    %9 = arith.extui %8 : i1 to i32
    %c0_i32_8 = arith.constant 0 : i32
    %10 = arith.cmpi ne, %9, %c0_i32_8 : i32
    scf.if %10 {
      %c0_9 = arith.constant 0 : index
      %c0_10 = arith.constant 0 : index
      %11 = vector.load %arg6[%c0_9, %c0_10] : memref<1x256xf32, #tpu.memory_space<vmem>>, vector<1x256xf32>
      %c0_i32_11 = arith.constant 0 : i32
      %12 = arith.sitofp %c0_i32_11 : i32 to f32
      %13 = vector.broadcast %12 : f32 to vector<1x51xf32>
      %14 = tpu.concatenate %13, %11 in 1 : vector<1x51xf32>, vector<1x256xf32> -> vector<1x307xf32>
      %15 = vector.broadcast %12 : f32 to vector<1x51xf32>
      %16 = tpu.concatenate %14, %15 in 1 : vector<1x307xf32>, vector<1x51xf32> -> vector<1x358xf32>
      %cst_12 = arith.constant 0.000000e+00 : f32
      %17 = vector.broadcast %cst_12 : f32 to vector<1x256xf32>
      %c0_13 = arith.constant 0 : index
      %c0_14 = arith.constant 0 : index
      %18 = vector.load %arg3[%c0_13, %c0_14] : memref<7x256xf32, #tpu.memory_space<vmem>>, vector<1x256xf32>
      %19 = vector.extract_strided_slice %16 {offsets = [0, 0], sizes = [1, 256], strides = [1, 1]} : vector<1x358xf32> to vector<1x256xf32>
      %c0_15 = arith.constant 0 : index
      %c0_16 = arith.constant 0 : index
      %20 = memref.load %arg2[%c0_15, %c0_16] : memref<7x7xf32, #tpu.memory_space<smem>>
      %21 = arith.mulf %19, %18 : vector<1x256xf32>
      %22 = vector.broadcast %20 : f32 to vector<1x256xf32>
      %23 = arith.mulf %22, %21 : vector<1x256xf32>
      %24 = arith.addf %17, %23 : vector<1x256xf32>
      %25 = vector.extract_strided_slice %16 {offsets = [0, 16], sizes = [1, 256], strides = [1, 1]} : vector<1x358xf32> to vector<1x256xf32>
      %c1 = arith.constant 1 : index
      %c0_17 = arith.constant 0 : index
      %26 = memref.load %arg2[%c1, %c0_17] : memref<7x7xf32, #tpu.memory_space<smem>>
      %27 = arith.mulf %25, %18 : vector<1x256xf32>
      %28 = vector.broadcast %26 : f32 to vector<1x256xf32>
      %29 = arith.mulf %28, %27 : vector<1x256xf32>
      %30 = arith.addf %24, %29 : vector<1x256xf32>
      %31 = vector.extract_strided_slice %16 {offsets = [0, 32], sizes = [1, 256], strides = [1, 1]} : vector<1x358xf32> to vector<1x256xf32>
      %c2 = arith.constant 2 : index
      %c0_18 = arith.constant 0 : index
      %32 = memref.load %arg2[%c2, %c0_18] : memref<7x7xf32, #tpu.memory_space<smem>>
      %33 = arith.mulf %31, %18 : vector<1x256xf32>
      %34 = vector.broadcast %32 : f32 to vector<1x256xf32>
      %35 = arith.mulf %34, %33 : vector<1x256xf32>
      %36 = arith.addf %30, %35 : vector<1x256xf32>
      %37 = vector.extract_strided_slice %16 {offsets = [0, 48], sizes = [1, 256], strides = [1, 1]} : vector<1x358xf32> to vector<1x256xf32>
      %c3 = arith.constant 3 : index
      %c0_19 = arith.constant 0 : index
      %38 = memref.load %arg2[%c3, %c0_19] : memref<7x7xf32, #tpu.memory_space<smem>>
      %39 = arith.mulf %37, %18 : vector<1x256xf32>
      %40 = vector.broadcast %38 : f32 to vector<1x256xf32>
      %41 = arith.mulf %40, %39 : vector<1x256xf32>
      %42 = arith.addf %36, %41 : vector<1x256xf32>
      %43 = vector.extract_strided_slice %16 {offsets = [0, 64], sizes = [1, 256], strides = [1, 1]} : vector<1x358xf32> to vector<1x256xf32>
      %c4 = arith.constant 4 : index
      %c0_20 = arith.constant 0 : index
      %44 = memref.load %arg2[%c4, %c0_20] : memref<7x7xf32, #tpu.memory_space<smem>>
      %45 = arith.mulf %43, %18 : vector<1x256xf32>
      %46 = vector.broadcast %44 : f32 to vector<1x256xf32>
      %47 = arith.mulf %46, %45 : vector<1x256xf32>
      %48 = arith.addf %42, %47 : vector<1x256xf32>
      %49 = vector.extract_strided_slice %16 {offsets = [0, 80], sizes = [1, 256], strides = [1, 1]} : vector<1x358xf32> to vector<1x256xf32>
      %c5 = arith.constant 5 : index
      %c0_21 = arith.constant 0 : index
      %50 = memref.load %arg2[%c5, %c0_21] : memref<7x7xf32, #tpu.memory_space<smem>>
      %51 = arith.mulf %49, %18 : vector<1x256xf32>
      %52 = vector.broadcast %50 : f32 to vector<1x256xf32>
      %53 = arith.mulf %52, %51 : vector<1x256xf32>
      %54 = arith.addf %48, %53 : vector<1x256xf32>
      %55 = vector.extract_strided_slice %16 {offsets = [0, 96], sizes = [1, 256], strides = [1, 1]} : vector<1x358xf32> to vector<1x256xf32>
      %c6 = arith.constant 6 : index
      %c0_22 = arith.constant 0 : index
      %56 = memref.load %arg2[%c6, %c0_22] : memref<7x7xf32, #tpu.memory_space<smem>>
      %57 = arith.mulf %55, %18 : vector<1x256xf32>
      %58 = vector.broadcast %56 : f32 to vector<1x256xf32>
      %59 = arith.mulf %58, %57 : vector<1x256xf32>
      %60 = arith.addf %54, %59 : vector<1x256xf32>
      %c1_23 = arith.constant 1 : index
      %c0_24 = arith.constant 0 : index
      %61 = vector.load %arg3[%c1_23, %c0_24] : memref<7x256xf32, #tpu.memory_space<vmem>>, vector<1x256xf32>
      %62 = vector.extract_strided_slice %16 {offsets = [0, 1], sizes = [1, 256], strides = [1, 1]} : vector<1x358xf32> to vector<1x256xf32>
      %c0_25 = arith.constant 0 : index
      %c1_26 = arith.constant 1 : index
      %63 = memref.load %arg2[%c0_25, %c1_26] : memref<7x7xf32, #tpu.memory_space<smem>>
      %64 = arith.mulf %62, %61 : vector<1x256xf32>
      %65 = vector.broadcast %63 : f32 to vector<1x256xf32>
      %66 = arith.mulf %65, %64 : vector<1x256xf32>
      %67 = arith.addf %60, %66 : vector<1x256xf32>
      %68 = vector.extract_strided_slice %16 {offsets = [0, 17], sizes = [1, 256], strides = [1, 1]} : vector<1x358xf32> to vector<1x256xf32>
      %c1_27 = arith.constant 1 : index
      %c1_28 = arith.constant 1 : index
      %69 = memref.load %arg2[%c1_27, %c1_28] : memref<7x7xf32, #tpu.memory_space<smem>>
      %70 = arith.mulf %68, %61 : vector<1x256xf32>
      %71 = vector.broadcast %69 : f32 to vector<1x256xf32>
      %72 = arith.mulf %71, %70 : vector<1x256xf32>
      %73 = arith.addf %67, %72 : vector<1x256xf32>
      %74 = vector.extract_strided_slice %16 {offsets = [0, 33], sizes = [1, 256], strides = [1, 1]} : vector<1x358xf32> to vector<1x256xf32>
      %c2_29 = arith.constant 2 : index
      %c1_30 = arith.constant 1 : index
      %75 = memref.load %arg2[%c2_29, %c1_30] : memref<7x7xf32, #tpu.memory_space<smem>>
      %76 = arith.mulf %74, %61 : vector<1x256xf32>
      %77 = vector.broadcast %75 : f32 to vector<1x256xf32>
      %78 = arith.mulf %77, %76 : vector<1x256xf32>
      %79 = arith.addf %73, %78 : vector<1x256xf32>
      %80 = vector.extract_strided_slice %16 {offsets = [0, 49], sizes = [1, 256], strides = [1, 1]} : vector<1x358xf32> to vector<1x256xf32>
      %c3_31 = arith.constant 3 : index
      %c1_32 = arith.constant 1 : index
      %81 = memref.load %arg2[%c3_31, %c1_32] : memref<7x7xf32, #tpu.memory_space<smem>>
      %82 = arith.mulf %80, %61 : vector<1x256xf32>
      %83 = vector.broadcast %81 : f32 to vector<1x256xf32>
      %84 = arith.mulf %83, %82 : vector<1x256xf32>
      %85 = arith.addf %79, %84 : vector<1x256xf32>
      %86 = vector.extract_strided_slice %16 {offsets = [0, 65], sizes = [1, 256], strides = [1, 1]} : vector<1x358xf32> to vector<1x256xf32>
      %c4_33 = arith.constant 4 : index
      %c1_34 = arith.constant 1 : index
      %87 = memref.load %arg2[%c4_33, %c1_34] : memref<7x7xf32, #tpu.memory_space<smem>>
      %88 = arith.mulf %86, %61 : vector<1x256xf32>
      %89 = vector.broadcast %87 : f32 to vector<1x256xf32>
      %90 = arith.mulf %89, %88 : vector<1x256xf32>
      %91 = arith.addf %85, %90 : vector<1x256xf32>
      %92 = vector.extract_strided_slice %16 {offsets = [0, 81], sizes = [1, 256], strides = [1, 1]} : vector<1x358xf32> to vector<1x256xf32>
      %c5_35 = arith.constant 5 : index
      %c1_36 = arith.constant 1 : index
      %93 = memref.load %arg2[%c5_35, %c1_36] : memref<7x7xf32, #tpu.memory_space<smem>>
      %94 = arith.mulf %92, %61 : vector<1x256xf32>
      %95 = vector.broadcast %93 : f32 to vector<1x256xf32>
      %96 = arith.mulf %95, %94 : vector<1x256xf32>
      %97 = arith.addf %91, %96 : vector<1x256xf32>
      %98 = vector.extract_strided_slice %16 {offsets = [0, 97], sizes = [1, 256], strides = [1, 1]} : vector<1x358xf32> to vector<1x256xf32>
      %c6_37 = arith.constant 6 : index
      %c1_38 = arith.constant 1 : index
      %99 = memref.load %arg2[%c6_37, %c1_38] : memref<7x7xf32, #tpu.memory_space<smem>>
      %100 = arith.mulf %98, %61 : vector<1x256xf32>
      %101 = vector.broadcast %99 : f32 to vector<1x256xf32>
      %102 = arith.mulf %101, %100 : vector<1x256xf32>
      %103 = arith.addf %97, %102 : vector<1x256xf32>
      %c2_39 = arith.constant 2 : index
      %c0_40 = arith.constant 0 : index
      %104 = vector.load %arg3[%c2_39, %c0_40] : memref<7x256xf32, #tpu.memory_space<vmem>>, vector<1x256xf32>
      %105 = vector.extract_strided_slice %16 {offsets = [0, 2], sizes = [1, 256], strides = [1, 1]} : vector<1x358xf32> to vector<1x256xf32>
      %c0_41 = arith.constant 0 : index
      %c2_42 = arith.constant 2 : index
      %106 = memref.load %arg2[%c0_41, %c2_42] : memref<7x7xf32, #tpu.memory_space<smem>>
      %107 = arith.mulf %105, %104 : vector<1x256xf32>
      %108 = vector.broadcast %106 : f32 to vector<1x256xf32>
      %109 = arith.mulf %108, %107 : vector<1x256xf32>
      %110 = arith.addf %103, %109 : vector<1x256xf32>
      %111 = vector.extract_strided_slice %16 {offsets = [0, 18], sizes = [1, 256], strides = [1, 1]} : vector<1x358xf32> to vector<1x256xf32>
      %c1_43 = arith.constant 1 : index
      %c2_44 = arith.constant 2 : index
      %112 = memref.load %arg2[%c1_43, %c2_44] : memref<7x7xf32, #tpu.memory_space<smem>>
      %113 = arith.mulf %111, %104 : vector<1x256xf32>
      %114 = vector.broadcast %112 : f32 to vector<1x256xf32>
      %115 = arith.mulf %114, %113 : vector<1x256xf32>
      %116 = arith.addf %110, %115 : vector<1x256xf32>
      %117 = vector.extract_strided_slice %16 {offsets = [0, 34], sizes = [1, 256], strides = [1, 1]} : vector<1x358xf32> to vector<1x256xf32>
      %c2_45 = arith.constant 2 : index
      %c2_46 = arith.constant 2 : index
      %118 = memref.load %arg2[%c2_45, %c2_46] : memref<7x7xf32, #tpu.memory_space<smem>>
      %119 = arith.mulf %117, %104 : vector<1x256xf32>
      %120 = vector.broadcast %118 : f32 to vector<1x256xf32>
      %121 = arith.mulf %120, %119 : vector<1x256xf32>
      %122 = arith.addf %116, %121 : vector<1x256xf32>
      %123 = vector.extract_strided_slice %16 {offsets = [0, 50], sizes = [1, 256], strides = [1, 1]} : vector<1x358xf32> to vector<1x256xf32>
      %c3_47 = arith.constant 3 : index
      %c2_48 = arith.constant 2 : index
      %124 = memref.load %arg2[%c3_47, %c2_48] : memref<7x7xf32, #tpu.memory_space<smem>>
      %125 = arith.mulf %123, %104 : vector<1x256xf32>
      %126 = vector.broadcast %124 : f32 to vector<1x256xf32>
      %127 = arith.mulf %126, %125 : vector<1x256xf32>
      %128 = arith.addf %122, %127 : vector<1x256xf32>
      %129 = vector.extract_strided_slice %16 {offsets = [0, 66], sizes = [1, 256], strides = [1, 1]} : vector<1x358xf32> to vector<1x256xf32>
      %c4_49 = arith.constant 4 : index
      %c2_50 = arith.constant 2 : index
      %130 = memref.load %arg2[%c4_49, %c2_50] : memref<7x7xf32, #tpu.memory_space<smem>>
      %131 = arith.mulf %129, %104 : vector<1x256xf32>
      %132 = vector.broadcast %130 : f32 to vector<1x256xf32>
      %133 = arith.mulf %132, %131 : vector<1x256xf32>
      %134 = arith.addf %128, %133 : vector<1x256xf32>
      %135 = vector.extract_strided_slice %16 {offsets = [0, 82], sizes = [1, 256], strides = [1, 1]} : vector<1x358xf32> to vector<1x256xf32>
      %c5_51 = arith.constant 5 : index
      %c2_52 = arith.constant 2 : index
      %136 = memref.load %arg2[%c5_51, %c2_52] : memref<7x7xf32, #tpu.memory_space<smem>>
      %137 = arith.mulf %135, %104 : vector<1x256xf32>
      %138 = vector.broadcast %136 : f32 to vector<1x256xf32>
      %139 = arith.mulf %138, %137 : vector<1x256xf32>
      %140 = arith.addf %134, %139 : vector<1x256xf32>
      %141 = vector.extract_strided_slice %16 {offsets = [0, 98], sizes = [1, 256], strides = [1, 1]} : vector<1x358xf32> to vector<1x256xf32>
      %c6_53 = arith.constant 6 : index
      %c2_54 = arith.constant 2 : index
      %142 = memref.load %arg2[%c6_53, %c2_54] : memref<7x7xf32, #tpu.memory_space<smem>>
      %143 = arith.mulf %141, %104 : vector<1x256xf32>
      %144 = vector.broadcast %142 : f32 to vector<1x256xf32>
      %145 = arith.mulf %144, %143 : vector<1x256xf32>
      %146 = arith.addf %140, %145 : vector<1x256xf32>
      %c3_55 = arith.constant 3 : index
      %c0_56 = arith.constant 0 : index
      %147 = vector.load %arg3[%c3_55, %c0_56] : memref<7x256xf32, #tpu.memory_space<vmem>>, vector<1x256xf32>
      %148 = vector.extract_strided_slice %16 {offsets = [0, 3], sizes = [1, 256], strides = [1, 1]} : vector<1x358xf32> to vector<1x256xf32>
      %c0_57 = arith.constant 0 : index
      %c3_58 = arith.constant 3 : index
      %149 = memref.load %arg2[%c0_57, %c3_58] : memref<7x7xf32, #tpu.memory_space<smem>>
      %150 = arith.mulf %148, %147 : vector<1x256xf32>
      %151 = vector.broadcast %149 : f32 to vector<1x256xf32>
      %152 = arith.mulf %151, %150 : vector<1x256xf32>
      %153 = arith.addf %146, %152 : vector<1x256xf32>
      %154 = vector.extract_strided_slice %16 {offsets = [0, 19], sizes = [1, 256], strides = [1, 1]} : vector<1x358xf32> to vector<1x256xf32>
      %c1_59 = arith.constant 1 : index
      %c3_60 = arith.constant 3 : index
      %155 = memref.load %arg2[%c1_59, %c3_60] : memref<7x7xf32, #tpu.memory_space<smem>>
      %156 = arith.mulf %154, %147 : vector<1x256xf32>
      %157 = vector.broadcast %155 : f32 to vector<1x256xf32>
      %158 = arith.mulf %157, %156 : vector<1x256xf32>
      %159 = arith.addf %153, %158 : vector<1x256xf32>
      %160 = vector.extract_strided_slice %16 {offsets = [0, 35], sizes = [1, 256], strides = [1, 1]} : vector<1x358xf32> to vector<1x256xf32>
      %c2_61 = arith.constant 2 : index
      %c3_62 = arith.constant 3 : index
      %161 = memref.load %arg2[%c2_61, %c3_62] : memref<7x7xf32, #tpu.memory_space<smem>>
      %162 = arith.mulf %160, %147 : vector<1x256xf32>
      %163 = vector.broadcast %161 : f32 to vector<1x256xf32>
      %164 = arith.mulf %163, %162 : vector<1x256xf32>
      %165 = arith.addf %159, %164 : vector<1x256xf32>
      %166 = vector.extract_strided_slice %16 {offsets = [0, 51], sizes = [1, 256], strides = [1, 1]} : vector<1x358xf32> to vector<1x256xf32>
      %c3_63 = arith.constant 3 : index
      %c3_64 = arith.constant 3 : index
      %167 = memref.load %arg2[%c3_63, %c3_64] : memref<7x7xf32, #tpu.memory_space<smem>>
      %168 = arith.mulf %166, %147 : vector<1x256xf32>
      %169 = vector.broadcast %167 : f32 to vector<1x256xf32>
      %170 = arith.mulf %169, %168 : vector<1x256xf32>
      %171 = arith.addf %165, %170 : vector<1x256xf32>
      %172 = vector.extract_strided_slice %16 {offsets = [0, 67], sizes = [1, 256], strides = [1, 1]} : vector<1x358xf32> to vector<1x256xf32>
      %c4_65 = arith.constant 4 : index
      %c3_66 = arith.constant 3 : index
      %173 = memref.load %arg2[%c4_65, %c3_66] : memref<7x7xf32, #tpu.memory_space<smem>>
      %174 = arith.mulf %172, %147 : vector<1x256xf32>
      %175 = vector.broadcast %173 : f32 to vector<1x256xf32>
      %176 = arith.mulf %175, %174 : vector<1x256xf32>
      %177 = arith.addf %171, %176 : vector<1x256xf32>
      %178 = vector.extract_strided_slice %16 {offsets = [0, 83], sizes = [1, 256], strides = [1, 1]} : vector<1x358xf32> to vector<1x256xf32>
      %c5_67 = arith.constant 5 : index
      %c3_68 = arith.constant 3 : index
      %179 = memref.load %arg2[%c5_67, %c3_68] : memref<7x7xf32, #tpu.memory_space<smem>>
      %180 = arith.mulf %178, %147 : vector<1x256xf32>
      %181 = vector.broadcast %179 : f32 to vector<1x256xf32>
      %182 = arith.mulf %181, %180 : vector<1x256xf32>
      %183 = arith.addf %177, %182 : vector<1x256xf32>
      %184 = vector.extract_strided_slice %16 {offsets = [0, 99], sizes = [1, 256], strides = [1, 1]} : vector<1x358xf32> to vector<1x256xf32>
      %c6_69 = arith.constant 6 : index
      %c3_70 = arith.constant 3 : index
      %185 = memref.load %arg2[%c6_69, %c3_70] : memref<7x7xf32, #tpu.memory_space<smem>>
      %186 = arith.mulf %184, %147 : vector<1x256xf32>
      %187 = vector.broadcast %185 : f32 to vector<1x256xf32>
      %188 = arith.mulf %187, %186 : vector<1x256xf32>
      %189 = arith.addf %183, %188 : vector<1x256xf32>
      %c4_71 = arith.constant 4 : index
      %c0_72 = arith.constant 0 : index
      %190 = vector.load %arg3[%c4_71, %c0_72] : memref<7x256xf32, #tpu.memory_space<vmem>>, vector<1x256xf32>
      %191 = vector.extract_strided_slice %16 {offsets = [0, 4], sizes = [1, 256], strides = [1, 1]} : vector<1x358xf32> to vector<1x256xf32>
      %c0_73 = arith.constant 0 : index
      %c4_74 = arith.constant 4 : index
      %192 = memref.load %arg2[%c0_73, %c4_74] : memref<7x7xf32, #tpu.memory_space<smem>>
      %193 = arith.mulf %191, %190 : vector<1x256xf32>
      %194 = vector.broadcast %192 : f32 to vector<1x256xf32>
      %195 = arith.mulf %194, %193 : vector<1x256xf32>
      %196 = arith.addf %189, %195 : vector<1x256xf32>
      %197 = vector.extract_strided_slice %16 {offsets = [0, 20], sizes = [1, 256], strides = [1, 1]} : vector<1x358xf32> to vector<1x256xf32>
      %c1_75 = arith.constant 1 : index
      %c4_76 = arith.constant 4 : index
      %198 = memref.load %arg2[%c1_75, %c4_76] : memref<7x7xf32, #tpu.memory_space<smem>>
      %199 = arith.mulf %197, %190 : vector<1x256xf32>
      %200 = vector.broadcast %198 : f32 to vector<1x256xf32>
      %201 = arith.mulf %200, %199 : vector<1x256xf32>
      %202 = arith.addf %196, %201 : vector<1x256xf32>
      %203 = vector.extract_strided_slice %16 {offsets = [0, 36], sizes = [1, 256], strides = [1, 1]} : vector<1x358xf32> to vector<1x256xf32>
      %c2_77 = arith.constant 2 : index
      %c4_78 = arith.constant 4 : index
      %204 = memref.load %arg2[%c2_77, %c4_78] : memref<7x7xf32, #tpu.memory_space<smem>>
      %205 = arith.mulf %203, %190 : vector<1x256xf32>
      %206 = vector.broadcast %204 : f32 to vector<1x256xf32>
      %207 = arith.mulf %206, %205 : vector<1x256xf32>
      %208 = arith.addf %202, %207 : vector<1x256xf32>
      %209 = vector.extract_strided_slice %16 {offsets = [0, 52], sizes = [1, 256], strides = [1, 1]} : vector<1x358xf32> to vector<1x256xf32>
      %c3_79 = arith.constant 3 : index
      %c4_80 = arith.constant 4 : index
      %210 = memref.load %arg2[%c3_79, %c4_80] : memref<7x7xf32, #tpu.memory_space<smem>>
      %211 = arith.mulf %209, %190 : vector<1x256xf32>
      %212 = vector.broadcast %210 : f32 to vector<1x256xf32>
      %213 = arith.mulf %212, %211 : vector<1x256xf32>
      %214 = arith.addf %208, %213 : vector<1x256xf32>
      %215 = vector.extract_strided_slice %16 {offsets = [0, 68], sizes = [1, 256], strides = [1, 1]} : vector<1x358xf32> to vector<1x256xf32>
      %c4_81 = arith.constant 4 : index
      %c4_82 = arith.constant 4 : index
      %216 = memref.load %arg2[%c4_81, %c4_82] : memref<7x7xf32, #tpu.memory_space<smem>>
      %217 = arith.mulf %215, %190 : vector<1x256xf32>
      %218 = vector.broadcast %216 : f32 to vector<1x256xf32>
      %219 = arith.mulf %218, %217 : vector<1x256xf32>
      %220 = arith.addf %214, %219 : vector<1x256xf32>
      %221 = vector.extract_strided_slice %16 {offsets = [0, 84], sizes = [1, 256], strides = [1, 1]} : vector<1x358xf32> to vector<1x256xf32>
      %c5_83 = arith.constant 5 : index
      %c4_84 = arith.constant 4 : index
      %222 = memref.load %arg2[%c5_83, %c4_84] : memref<7x7xf32, #tpu.memory_space<smem>>
      %223 = arith.mulf %221, %190 : vector<1x256xf32>
      %224 = vector.broadcast %222 : f32 to vector<1x256xf32>
      %225 = arith.mulf %224, %223 : vector<1x256xf32>
      %226 = arith.addf %220, %225 : vector<1x256xf32>
      %227 = vector.extract_strided_slice %16 {offsets = [0, 100], sizes = [1, 256], strides = [1, 1]} : vector<1x358xf32> to vector<1x256xf32>
      %c6_85 = arith.constant 6 : index
      %c4_86 = arith.constant 4 : index
      %228 = memref.load %arg2[%c6_85, %c4_86] : memref<7x7xf32, #tpu.memory_space<smem>>
      %229 = arith.mulf %227, %190 : vector<1x256xf32>
      %230 = vector.broadcast %228 : f32 to vector<1x256xf32>
      %231 = arith.mulf %230, %229 : vector<1x256xf32>
      %232 = arith.addf %226, %231 : vector<1x256xf32>
      %c5_87 = arith.constant 5 : index
      %c0_88 = arith.constant 0 : index
      %233 = vector.load %arg3[%c5_87, %c0_88] : memref<7x256xf32, #tpu.memory_space<vmem>>, vector<1x256xf32>
      %234 = vector.extract_strided_slice %16 {offsets = [0, 5], sizes = [1, 256], strides = [1, 1]} : vector<1x358xf32> to vector<1x256xf32>
      %c0_89 = arith.constant 0 : index
      %c5_90 = arith.constant 5 : index
      %235 = memref.load %arg2[%c0_89, %c5_90] : memref<7x7xf32, #tpu.memory_space<smem>>
      %236 = arith.mulf %234, %233 : vector<1x256xf32>
      %237 = vector.broadcast %235 : f32 to vector<1x256xf32>
      %238 = arith.mulf %237, %236 : vector<1x256xf32>
      %239 = arith.addf %232, %238 : vector<1x256xf32>
      %240 = vector.extract_strided_slice %16 {offsets = [0, 21], sizes = [1, 256], strides = [1, 1]} : vector<1x358xf32> to vector<1x256xf32>
      %c1_91 = arith.constant 1 : index
      %c5_92 = arith.constant 5 : index
      %241 = memref.load %arg2[%c1_91, %c5_92] : memref<7x7xf32, #tpu.memory_space<smem>>
      %242 = arith.mulf %240, %233 : vector<1x256xf32>
      %243 = vector.broadcast %241 : f32 to vector<1x256xf32>
      %244 = arith.mulf %243, %242 : vector<1x256xf32>
      %245 = arith.addf %239, %244 : vector<1x256xf32>
      %246 = vector.extract_strided_slice %16 {offsets = [0, 37], sizes = [1, 256], strides = [1, 1]} : vector<1x358xf32> to vector<1x256xf32>
      %c2_93 = arith.constant 2 : index
      %c5_94 = arith.constant 5 : index
      %247 = memref.load %arg2[%c2_93, %c5_94] : memref<7x7xf32, #tpu.memory_space<smem>>
      %248 = arith.mulf %246, %233 : vector<1x256xf32>
      %249 = vector.broadcast %247 : f32 to vector<1x256xf32>
      %250 = arith.mulf %249, %248 : vector<1x256xf32>
      %251 = arith.addf %245, %250 : vector<1x256xf32>
      %252 = vector.extract_strided_slice %16 {offsets = [0, 53], sizes = [1, 256], strides = [1, 1]} : vector<1x358xf32> to vector<1x256xf32>
      %c3_95 = arith.constant 3 : index
      %c5_96 = arith.constant 5 : index
      %253 = memref.load %arg2[%c3_95, %c5_96] : memref<7x7xf32, #tpu.memory_space<smem>>
      %254 = arith.mulf %252, %233 : vector<1x256xf32>
      %255 = vector.broadcast %253 : f32 to vector<1x256xf32>
      %256 = arith.mulf %255, %254 : vector<1x256xf32>
      %257 = arith.addf %251, %256 : vector<1x256xf32>
      %258 = vector.extract_strided_slice %16 {offsets = [0, 69], sizes = [1, 256], strides = [1, 1]} : vector<1x358xf32> to vector<1x256xf32>
      %c4_97 = arith.constant 4 : index
      %c5_98 = arith.constant 5 : index
      %259 = memref.load %arg2[%c4_97, %c5_98] : memref<7x7xf32, #tpu.memory_space<smem>>
      %260 = arith.mulf %258, %233 : vector<1x256xf32>
      %261 = vector.broadcast %259 : f32 to vector<1x256xf32>
      %262 = arith.mulf %261, %260 : vector<1x256xf32>
      %263 = arith.addf %257, %262 : vector<1x256xf32>
      %264 = vector.extract_strided_slice %16 {offsets = [0, 85], sizes = [1, 256], strides = [1, 1]} : vector<1x358xf32> to vector<1x256xf32>
      %c5_99 = arith.constant 5 : index
      %c5_100 = arith.constant 5 : index
      %265 = memref.load %arg2[%c5_99, %c5_100] : memref<7x7xf32, #tpu.memory_space<smem>>
      %266 = arith.mulf %264, %233 : vector<1x256xf32>
      %267 = vector.broadcast %265 : f32 to vector<1x256xf32>
      %268 = arith.mulf %267, %266 : vector<1x256xf32>
      %269 = arith.addf %263, %268 : vector<1x256xf32>
      %270 = vector.extract_strided_slice %16 {offsets = [0, 101], sizes = [1, 256], strides = [1, 1]} : vector<1x358xf32> to vector<1x256xf32>
      %c6_101 = arith.constant 6 : index
      %c5_102 = arith.constant 5 : index
      %271 = memref.load %arg2[%c6_101, %c5_102] : memref<7x7xf32, #tpu.memory_space<smem>>
      %272 = arith.mulf %270, %233 : vector<1x256xf32>
      %273 = vector.broadcast %271 : f32 to vector<1x256xf32>
      %274 = arith.mulf %273, %272 : vector<1x256xf32>
      %275 = arith.addf %269, %274 : vector<1x256xf32>
      %c6_103 = arith.constant 6 : index
      %c0_104 = arith.constant 0 : index
      %276 = vector.load %arg3[%c6_103, %c0_104] : memref<7x256xf32, #tpu.memory_space<vmem>>, vector<1x256xf32>
      %277 = vector.extract_strided_slice %16 {offsets = [0, 6], sizes = [1, 256], strides = [1, 1]} : vector<1x358xf32> to vector<1x256xf32>
      %c0_105 = arith.constant 0 : index
      %c6_106 = arith.constant 6 : index
      %278 = memref.load %arg2[%c0_105, %c6_106] : memref<7x7xf32, #tpu.memory_space<smem>>
      %279 = arith.mulf %277, %276 : vector<1x256xf32>
      %280 = vector.broadcast %278 : f32 to vector<1x256xf32>
      %281 = arith.mulf %280, %279 : vector<1x256xf32>
      %282 = arith.addf %275, %281 : vector<1x256xf32>
      %283 = vector.extract_strided_slice %16 {offsets = [0, 22], sizes = [1, 256], strides = [1, 1]} : vector<1x358xf32> to vector<1x256xf32>
      %c1_107 = arith.constant 1 : index
      %c6_108 = arith.constant 6 : index
      %284 = memref.load %arg2[%c1_107, %c6_108] : memref<7x7xf32, #tpu.memory_space<smem>>
      %285 = arith.mulf %283, %276 : vector<1x256xf32>
      %286 = vector.broadcast %284 : f32 to vector<1x256xf32>
      %287 = arith.mulf %286, %285 : vector<1x256xf32>
      %288 = arith.addf %282, %287 : vector<1x256xf32>
      %289 = vector.extract_strided_slice %16 {offsets = [0, 38], sizes = [1, 256], strides = [1, 1]} : vector<1x358xf32> to vector<1x256xf32>
      %c2_109 = arith.constant 2 : index
      %c6_110 = arith.constant 6 : index
      %290 = memref.load %arg2[%c2_109, %c6_110] : memref<7x7xf32, #tpu.memory_space<smem>>
      %291 = arith.mulf %289, %276 : vector<1x256xf32>
      %292 = vector.broadcast %290 : f32 to vector<1x256xf32>
      %293 = arith.mulf %292, %291 : vector<1x256xf32>
      %294 = arith.addf %288, %293 : vector<1x256xf32>
      %295 = vector.extract_strided_slice %16 {offsets = [0, 54], sizes = [1, 256], strides = [1, 1]} : vector<1x358xf32> to vector<1x256xf32>
      %c3_111 = arith.constant 3 : index
      %c6_112 = arith.constant 6 : index
      %296 = memref.load %arg2[%c3_111, %c6_112] : memref<7x7xf32, #tpu.memory_space<smem>>
      %297 = arith.mulf %295, %276 : vector<1x256xf32>
      %298 = vector.broadcast %296 : f32 to vector<1x256xf32>
      %299 = arith.mulf %298, %297 : vector<1x256xf32>
      %300 = arith.addf %294, %299 : vector<1x256xf32>
      %301 = vector.extract_strided_slice %16 {offsets = [0, 70], sizes = [1, 256], strides = [1, 1]} : vector<1x358xf32> to vector<1x256xf32>
      %c4_113 = arith.constant 4 : index
      %c6_114 = arith.constant 6 : index
      %302 = memref.load %arg2[%c4_113, %c6_114] : memref<7x7xf32, #tpu.memory_space<smem>>
      %303 = arith.mulf %301, %276 : vector<1x256xf32>
      %304 = vector.broadcast %302 : f32 to vector<1x256xf32>
      %305 = arith.mulf %304, %303 : vector<1x256xf32>
      %306 = arith.addf %300, %305 : vector<1x256xf32>
      %307 = vector.extract_strided_slice %16 {offsets = [0, 86], sizes = [1, 256], strides = [1, 1]} : vector<1x358xf32> to vector<1x256xf32>
      %c5_115 = arith.constant 5 : index
      %c6_116 = arith.constant 6 : index
      %308 = memref.load %arg2[%c5_115, %c6_116] : memref<7x7xf32, #tpu.memory_space<smem>>
      %309 = arith.mulf %307, %276 : vector<1x256xf32>
      %310 = vector.broadcast %308 : f32 to vector<1x256xf32>
      %311 = arith.mulf %310, %309 : vector<1x256xf32>
      %312 = arith.addf %306, %311 : vector<1x256xf32>
      %313 = vector.extract_strided_slice %16 {offsets = [0, 102], sizes = [1, 256], strides = [1, 1]} : vector<1x358xf32> to vector<1x256xf32>
      %c6_117 = arith.constant 6 : index
      %c6_118 = arith.constant 6 : index
      %314 = memref.load %arg2[%c6_117, %c6_118] : memref<7x7xf32, #tpu.memory_space<smem>>
      %315 = arith.mulf %313, %276 : vector<1x256xf32>
      %316 = vector.broadcast %314 : f32 to vector<1x256xf32>
      %317 = arith.mulf %316, %315 : vector<1x256xf32>
      %318 = arith.addf %312, %317 : vector<1x256xf32>
      %cst_119 = arith.constant 0.000000e+00 : f32
      %319 = vector.broadcast %cst_119 : f32 to vector<1x256xf32>
      %320 = arith.subf %319, %318 : vector<1x256xf32>
      %321 = math.exp %320 : vector<1x256xf32>
      %cst_120 = arith.constant 1.000000e+00 : f32
      %322 = vector.broadcast %cst_120 : f32 to vector<1x256xf32>
      %323 = arith.addf %322, %321 : vector<1x256xf32>
      %324 = tpu.reciprocal %323 : vector<1x256xf32> -> vector<1x256xf32>
      %c0_121 = arith.constant 0 : index
      %c0_122 = arith.constant 0 : index
      %c0_123 = arith.constant 0 : index
      %325 = vector.load %arg5[%c0_121, %c0_122, %c0_123] : memref<1x1x256xf32, #tpu.memory_space<vmem>>, vector<1x1x256xf32>
      %326 = vector.shape_cast %325 : vector<1x1x256xf32> to vector<1x256xf32>
      %327 = vector.shape_cast %324 : vector<1x256xf32> to vector<1x1x256xf32>
      tpu.vector_store %arg5[%c0_121, %c0_122, %c0_123], %327 {strides = array<i32>} : memref<1x1x256xf32, #tpu.memory_space<vmem>>, vector<1x1x256xf32>,
    } else {
    }
    return
  }
  func.func @transform_0(%arg0: i32, %arg1: i32) -> (i32, i32) {
    %c0_i32 = arith.constant 0 : i32
    %c0_i32_0 = arith.constant 0 : i32
    %c0_i32_1 = arith.constant 0 : i32
    return %c0_i32, %c0_i32_0 : i32, i32
  }
  func.func @transform_1(%arg0: i32, %arg1: i32) -> (i32, i32) {
    %c0_i32 = arith.constant 0 : i32
    %c0_i32_0 = arith.constant 0 : i32
    %c0_i32_1 = arith.constant 0 : i32
    return %c0_i32, %c0_i32_0 : i32, i32
  }
  func.func @transform_2(%arg0: i32, %arg1: i32) -> (i32, i32, i32) {
    %c0_i32 = arith.constant 0 : i32
    %c0_i32_0 = arith.constant 0 : i32
    return %arg0, %arg1, %c0_i32 : i32, i32, i32
  }
  func.func @transform_3(%arg0: i32, %arg1: i32) -> (i32, i32, i32) {
    %c0_i32 = arith.constant 0 : i32
    %c0_i32_0 = arith.constant 0 : i32
    %c0_i32_1 = arith.constant 0 : i32
    return %arg0, %c0_i32, %c0_i32_0 : i32, i32, i32
  }
}

</mosaic_0001>

<llo_original>
// kernel: tpu_custom_call.1
$region0: #{tpu_custom_call.1}
  #allocation0 [shape = 'u32[]', space=smem, size = 0x4, offset = 0x4, fixed_abs, tag = 'smem constant byte address 0x4 - core index']
  #allocation1 [shape = 'u32[144,128]{1,0:T(1,128)}', space=vmem, size = 0x12000, scoped, tag = 'internal scratch']
  #allocation2 [shape = 'f32[1,256]{1,0:T(1,128)}', space=vmem, size = 0x400, scoped, tag = 'scratch operand']
  %s0 = inlined_call_operand.hbm [shape: f32[7,7], index: 0, kind: input, shape index: {}]
  %s1 = inlined_call_operand.hbm [shape: f32[7,256], index: 1, kind: input, shape index: {}]
  %s2 = inlined_call_operand.hbm [shape: f32[2,4,256], index: 2, kind: input, shape index: {}]
  %s3 = inlined_call_operand.hbm [shape: f32[2,1,256], index: 3, kind: output, shape index: {}]
  %s4 = sld [smem:[#allocation0]]
  $region65: #{tpu_custom_call.1} parent=0
    _
  %s6 = ssub.s32 1, %s4
  %s7 = scalar_select 0, %s6, %s4
  $region1: #{tpu_custom_call.1} parent=0
    #allocation3 [shape = 'u8[4096]{0}', space=smem, size = 0x1000, scoped, tag = 'input window, operand 0, single buffered']
    #allocation4 [shape = 's32[2]{0}', space=sflag, size = 0x8, scoped, tag = 'scoped memory for tpu_custom_call.1']
    #allocation5 [shape = 's32[2]{0}', space=sflag, size = 0x8, scoped, tag = 'scoped memory for tpu_custom_call.1']
    #allocation6 [shape = 's32[2]{0}', space=sflag, size = 0x8, scoped, tag = 'scoped memory for tpu_custom_call.1']
    #allocation7 [shape = 'u8[8192]{0}', space=vmem, size = 0x2000, scoped, tag = 'input window, operand 1, single buffered']
    #allocation8 [shape = 'u8[8192]{0}', space=vmem, size = 0x2000, scoped, tag = 'input window, operand 2']
    #allocation9 [shape = 's32[2]{0}', space=sflag, size = 0x8, scoped, tag = 'scoped memory for tpu_custom_call.1']
    #allocation10 [shape = 'u8[2048]{0}', space=vmem, size = 0x800, scoped, tag = 'output window, operand 0']
    %8 = vsyncpa [#allocation6], 0
    %9 = vsyncpa [#allocation4], 0
    %10 = vsyncpa [#allocation9], 0
    %s11 = scalar_lea.sflag [#allocation9], 1
    %12 = vsyncpa %s11, 0
    %13 = vsyncpa [#allocation5], 0
    %s14 = scalar_lea.sflag [#allocation5], 1
    %15 = vsyncpa %s14, 0
    loop: start=0, step=1, limit=4
    $region2: #{tpu_custom_call.1} parent=1 // loop_pre_header
      _
    $region3: #{tpu_custom_call.1} parent=1 // loop_header
      %s17 = sphi 0, %s21
      %p18 = scmp.ge.s32.totalorder %s17, 4
      %s24 = sphi 0, %s36
      %s25 = sphi 0, %s32
      %s26 = sphi 0, %s24
      %s27 = sphi 0, %s25
      %s28 = sphi 0, %s26
      %s29 = sphi 0, %s27
      %s37 = sphi 0, %s37
      %s39 = sphi 0, %s37
      %s40 = sphi 0, %s39
      %s54 = sphi 0, %s40
      %s58 = sphi 0, %s58
      %s60 = sphi 0, %s58
      %s61 = sphi 0, %s60
      %s75 = sphi 0, %s61
      %s83 = sphi 0, %s85
      %s86 = sphi 0, %s83
      %s87 = sphi 0, %s86
      %s103 = sphi 0, %s87
      %s109 = sphi 0, %s111
      %s112 = sphi 0, %s109
      %s113 = sphi 0, %s112
      %s129 = sphi 0, %s113
    $region4: #{tpu_custom_call.1} parent=1 // loop_header_branch
      %20 = sbr.rel (%p18) target = $region8
    $region5: #{tpu_custom_call.1} parent=1 // loop_body
      %s22 = ssub.s32 %s17, 1
      %s23 = ssub.s32 %s17, 2
      %s30 = sadd.s32 1, %s25
      %p31 = scmp.ge.s32.totalorder %s30, 1
      %s32 = scalar_select %p31, 0, %s30
      %s33 = sadd.s32 1, %s24
      %s34 = scalar_select %p31, %s33, %s24
      %p35 = scmp.ge.s32.totalorder %s34, 2
      %s36 = scalar_select %p35, 0, %s34
      %s38 = sadd.s32 %s37, 1
      %p41 = scmp.eq.s32.totalorder %s17, 1
      %p42 = scmp.ne.s32.totalorder %s37, %s39
      %p43 = scmp.eq.s32.totalorder %s17, 0
      %p44 = por %p42, %p43
      %p45 = scmp.ne.s32.totalorder %s37, %s39
      %p46 = scmp.eq.s32.totalorder %s22, 1
      %p47 = por %p45, %p46
      %p48 = scmp.ne.s32.totalorder %s39, %s40
      %p49 = scmp.eq.s32.totalorder %s22, 0
      %p50 = por %p48, %p49
      %p51 = scmp.ne.s32.totalorder %s39, %s40
      %p52 = scmp.eq.s32.totalorder %s23, 1
      %p53 = por %p51, %p52
      %p55 = scmp.ne.s32.totalorder %s40, %s54
      %p56 = scmp.eq.s32.totalorder %s23, 0
      %p57 = por %p55, %p56
      %s59 = sadd.s32 %s58, 1
      %p62 = scmp.eq.s32.totalorder %s17, 1
      %p63 = scmp.ne.s32.totalorder %s58, %s60
      %p64 = scmp.eq.s32.totalorder %s17, 0
      %p65 = por %p63, %p64
      %p66 = scmp.ne.s32.totalorder %s58, %s60
      %p67 = scmp.eq.s32.totalorder %s22, 1
      %p68 = por %p66, %p67
      %p69 = scmp.ne.s32.totalorder %s60, %s61
      %p70 = scmp.eq.s32.totalorder %s22, 0
      %p71 = por %p69, %p70
      %p72 = scmp.ne.s32.totalorder %s60, %s61
      %p73 = scmp.eq.s32.totalorder %s23, 1
      %p74 = por %p72, %p73
      %p76 = scmp.ne.s32.totalorder %s61, %s75
      %p77 = scmp.eq.s32.totalorder %s23, 0
      %p78 = por %p76, %p77
      %s79 = ssub.s32 %s24, %s36
      %s80 = ssub.s32 %s25, %s32
      %s81 = sor.u32 %s79, %s80
      %p82 = scmp.eq.s32.totalorder %s81, 0
      %s84 = sadd.s32 %s83, 1
      %s85 = scalar_select %p82, %s83, %s84
      %p88 = pneg %p82
      %p89 = scmp.eq.s32.totalorder %s17, 1
      %p90 = por %p88, %p89
      %p91 = scmp.ne.s32.totalorder %s83, %s86
      %p92 = scmp.eq.s32.totalorder %s17, 0
      %p93 = por %p91, %p92
      %p94 = scmp.ne.s32.totalorder %s83, %s86
      %p95 = scmp.eq.s32.totalorder %s22, 1
      %p96 = por %p94, %p95
      %p97 = scmp.ne.s32.totalorder %s86, %s87
      %p98 = scmp.eq.s32.totalorder %s22, 0
      %p99 = por %p97, %p98
      %p100 = scmp.ne.s32.totalorder %s86, %s87
      %p101 = scmp.eq.s32.totalorder %s23, 1
      %p102 = por %p100, %p101
      %p104 = scmp.ne.s32.totalorder %s87, %s103
      %p105 = scmp.eq.s32.totalorder %s23, 0
      %p106 = por %p104, %p105
      %s107 = ssub.s32 %s24, %s36
      %p108 = scmp.eq.s32.totalorder %s107, 0
      %s110 = sadd.s32 %s109, 1
      %s111 = scalar_select %p108, %s109, %s110
      %p114 = pneg %p108
      %p115 = scmp.eq.s32.totalorder %s17, 1
      %p116 = por %p114, %p115
      %p117 = scmp.ne.s32.totalorder %s109, %s112
      %p118 = scmp.eq.s32.totalorder %s17, 0
      %p119 = por %p117, %p118
      %p120 = scmp.ne.s32.totalorder %s109, %s112
      %p121 = scmp.eq.s32.totalorder %s22, 1
      %p122 = por %p120, %p121
      %p123 = scmp.ne.s32.totalorder %s112, %s113
      %p124 = scmp.eq.s32.totalorder %s22, 0
      %p125 = por %p123, %p124
      %p126 = scmp.ne.s32.totalorder %s112, %s113
      %p127 = scmp.eq.s32.totalorder %s23, 1
      %p128 = por %p126, %p127
      %p130 = scmp.ne.s32.totalorder %s113, %s129
      %p131 = scmp.eq.s32.totalorder %s23, 0
      %p132 = por %p130, %p131
      %p133 = scmp.le.s32.totalorder 1, %s17
      %p134 = scmp.lt.s32.totalorder %s17, 3
      %p135 = pnand %p133, %p134
      %p136 = pneg %p135
      // Predicated region
      $region9: #{tpu_custom_call.1} parent=5 // pred_check
        _
      $region10: #{tpu_custom_call.1} parent=5 // pred_check_branch
        %138 = sbr.rel (%p135) target = $region12
      $region11: #{tpu_custom_call.1} parent=5 // pred_region
        %s139 = ssub.s32 %s17, 1
        // Predicated region
        $region13: #{tpu_custom_call.1} parent=11 // pred_check
          %p140 = pneg %p50
        $region14: #{tpu_custom_call.1} parent=11 // pred_check_branch
          %142 = sbr.rel (%p140) target = $region16
        $region15: #{tpu_custom_call.1} parent=11 // pred_region
          %s144 = ssub.s32 128, 128
          %145 = vsyncadd [#allocation6], %s144
          %148 = dma.hbm_to_smem %s0, 128, [#allocation3], [#allocation6]
        $region16: #{tpu_custom_call.1} parent=11 // pred_fallthru
          _
        // Predicated region
        $region17: #{tpu_custom_call.1} parent=11 // pred_check
          %p149 = pneg %p71
        $region18: #{tpu_custom_call.1} parent=11 // pred_check_branch
          %151 = sbr.rel (%p149) target = $region20
        $region19: #{tpu_custom_call.1} parent=11 // pred_region
          %s153 = ssub.s32 256, 256
          %154 = vsyncadd [#allocation4], %s153
          %s156 = sshll.u32 [#allocation7], 4
          %s157 = int_to_ptr.vmem [resolvable:$true] %s156
          %159 = dma.hbm_to_vmem [thread:$0]  %s1, 256, %s157, [#allocation4]
        $region20: #{tpu_custom_call.1} parent=11 // pred_fallthru
          _
      $region12: #{tpu_custom_call.1} parent=5 // pred_fallthru
        _
      %p160 = scmp.lt.s32.totalorder %s17, 2
      // Predicated region
      $region21: #{tpu_custom_call.1} parent=5 // pred_check
        %p161 = pneg %p160
      $region22: #{tpu_custom_call.1} parent=5 // pred_check_branch
        %163 = sbr.rel (%p161) target = $region24
      $region23: #{tpu_custom_call.1} parent=5 // pred_region
        // Predicated region
        $region25: #{tpu_custom_call.1} parent=23 // pred_check
          %p164 = pneg %p93
        $region26: #{tpu_custom_call.1} parent=23 // pred_check_branch
          %166 = sbr.rel (%p164) target = $region28
        $region27: #{tpu_custom_call.1} parent=23 // pred_region
          %s167 = sand.u32 %s83, 1
          %s168 = scalar_lea.sflag [#allocation9], %s167
          %s169 = sand.u32 %s83, 1
          %s170 = smul.addr %s169, 8
          %s171 = scalar_lea.vmem [#allocation8], %s170
          %s173 = ssub.s32 128, 128
          %174 = vsyncadd %s168, %s173
          %s175 = smul.addr %s25, 2
          %s176 = smul.addr %s24, 2
          %s177 = sadd.s32 %s175, %s176
          %s178 = smul.addr %s177, 64
          %s179 = scalar_lea.hbm %s2, %s178
          %s181 = sshll.u32 %s171, 4
          %s182 = int_to_ptr.vmem [resolvable:$true] %s181
          %184 = dma.hbm_to_vmem [thread:$0]  %s179, 128, %s182, %s168
        $region28: #{tpu_custom_call.1} parent=23 // pred_fallthru
          _
      $region24: #{tpu_custom_call.1} parent=5 // pred_fallthru
        _
      %p185 = scmp.le.s32.totalorder 1, %s17
      %p186 = scmp.lt.s32.totalorder %s17, 3
      %p187 = pnand %p185, %p186
      %p188 = pneg %p187
      // Predicated region
      $region29: #{tpu_custom_call.1} parent=5 // pred_check
        _
      $region30: #{tpu_custom_call.1} parent=5 // pred_check_branch
        %190 = sbr.rel (%p187) target = $region32
      $region31: #{tpu_custom_call.1} parent=5 // pred_region
        %s191 = ssub.s32 %s17, 1
        // Predicated region
        $region33: #{tpu_custom_call.1} parent=31 // pred_check
          %p192 = pneg %p50
        $region34: #{tpu_custom_call.1} parent=31 // pred_check_branch
          %194 = sbr.rel (%p192) target = $region36
        $region35: #{tpu_custom_call.1} parent=31 // pred_region
          %195 = dma.done [#allocation6], 128
        $region36: #{tpu_custom_call.1} parent=31 // pred_fallthru
          _
        // Predicated region
        $region37: #{tpu_custom_call.1} parent=31 // pred_check
          %p196 = pneg %p71
        $region38: #{tpu_custom_call.1} parent=31 // pred_check_branch
          %198 = sbr.rel (%p196) target = $region40
        $region39: #{tpu_custom_call.1} parent=31 // pred_region
          %199 = dma.done [#allocation4], 256
        $region40: #{tpu_custom_call.1} parent=31 // pred_fallthru
          _
        %s200 = sand.u32 %s86, 1
        %s201 = scalar_lea.sflag [#allocation9], %s200
        %s202 = sand.u32 %s86, 1
        %s203 = smul.addr %s202, 8
        %s204 = scalar_lea.vmem [#allocation8], %s203
        // Predicated region
        $region41: #{tpu_custom_call.1} parent=31 // pred_check
          %p205 = pneg %p99
        $region42: #{tpu_custom_call.1} parent=31 // pred_check_branch
          %207 = sbr.rel (%p205) target = $region44
        $region43: #{tpu_custom_call.1} parent=31 // pred_region
          %208 = dma.done %s201, 128
        $region44: #{tpu_custom_call.1} parent=31 // pred_fallthru
          _
        %209 = sfence
        %p210 = pneg %p50
        %p211 = pneg %p47
        %p212 = pneg %p71
        %p213 = pneg %p68
        %s214 = sand.u32 %s86, 1
        %s215 = scalar_lea.sflag [#allocation9], %s214
        %s216 = sand.u32 %s86, 1
        %s217 = smul.addr %s216, 8
        %s218 = scalar_lea.vmem [#allocation8], %s217
        %p219 = pneg %p99
        %p220 = pneg %p96
        %p221 = pneg %p125
        %p222 = pneg %p122
        %s223 = sand.u32 %s112, 1
        %s224 = scalar_lea.sflag [#allocation5], %s223
        %s225 = sand.u32 %s112, 1
        %s226 = smul.addr %s225, 2
        %s227 = scalar_lea.vmem [#allocation10], %s226
        %p228 = scmp.eq.s32.totalorder %s27, 0
        // Predicated region
        $region45: #{tpu_custom_call.1} parent=31 // pred_check
          %p229 = pneg %p228
        $region46: #{tpu_custom_call.1} parent=31 // pred_check_branch
          %231 = sbr.rel (%p229) target = $region48
        $region47: #{tpu_custom_call.1} parent=31 // pred_region
          %v232 = vlaneseq
          %vm233 = vcmp.ge.s32.totalorder %v232, 0
          %vm234 = vcmp.lt.s32.totalorder %v232, 256
          %vm235 = vmand %vm233, %vm234
          %236 = vst.msk [vmem:[#allocation2] sm:$0x3] %vm235, -inf
        $region48: #{tpu_custom_call.1} parent=31 // pred_fallthru
          _
        %v237 = vld [vmem:[#allocation2] sm:$0x3]
        %v238 = vld [vmem:[%s204] sm:$0xff]
        %v240 = vcombine.high %v238, %v238
        %vm242 = vcmask 1043456
        %v243 = vsel %vm242, %v238, -inf
        %v244 = vrot.slane %v243, 4
        %v245 = vmax.f32 %v243, %v244
        %v246 = vrot.slane %v245, 2
        %v247 = vmax.f32 %v245, %v246
        %v248 = vrot.slane %v247, 1
        %v249 = vmax.f32 %v247, %v248
        %v250 = vsel %vm242, %v240, -inf
        %v251 = vrot.slane %v250, 4
        %v252 = vmax.f32 %v250, %v251
        %v253 = vrot.slane %v252, 2
        %v254 = vmax.f32 %v252, %v253
        %v255 = vrot.slane %v254, 1
        %v256 = vmax.f32 %v254, %v255
        %v259 = vcombine.low %v249, %v256
        %v261 = vunpack.c.l.s4 1966171168
        %v262 = vunpack.c.0.s8 %v261
        %v263 = vlaneseq
        %v264 = vshrl.u32 %v263, 7
        %v265 = vsub.s32 %v262, %v264
        %v266 = vrot.slane %v259, %v265
        %v268 = vunpack.c.l.s4 1966171168
        %v269 = vunpack.c.0.s8 %v268
        %v270 = vlaneseq
        %v271 = vshrl.u32 %v270, 7
        %v272 = vsub.s32 %v269, %v271
        %v273 = vrot.slane %v266, %v272
        %v275 = vmax.f32 %v237, %v273
        %v276 = vlaneseq
        %vm277 = vcmp.ge.s32.totalorder %v276, 0
        %vm278 = vcmp.lt.s32.totalorder %v276, 256
        %vm279 = vmand %vm277, %vm278
        %280 = vst.msk [vmem:[#allocation2] sm:$0x3] %vm279, %v275
        // Predicated region
        $region49: #{tpu_custom_call.1} parent=31 // pred_check
          %p281 = pneg %p228
        $region50: #{tpu_custom_call.1} parent=31 // pred_check_branch
          %283 = sbr.rel (%p281) target = $region52
        $region51: #{tpu_custom_call.1} parent=31 // pred_region
          %v284 = vld [vmem:[#allocation2] sm:$0x3]
          %v286 = vlaneseq
          %v287 = vshrl.u32 %v286, 7
          %v288 = vsub.s32 0, %v287
          %v289 = vrot.slane %v284, %v288
          %v290 = vlaneseq
          %v291 = vshrl.u32 %v290, 7
          %v292 = vsub.s32 1, %v291
          %v293 = vrot.slane %v284, %v292
          %294 = vrot.lane.b32.xlu0 %v289, 51
          %v295 = vpop.permute.xlu0 %294
          %296 = vrot.lane.b32.xlu0 %v293, 51
          %v297 = vpop.permute.xlu0 %296
          %vm298 = vcmask 416768
          %v299 = vsel %vm298, %v295, %v297
          %v303 = vsel %vm298, 0.0, %v295
          %v304 = vsel %vm298, %v297, 0.0
          %v305 = vld [vmem:[#allocation7] ss:$8 sm:$0x3]
          %s306 = sld [smem:[#allocation3]]
          %v308 = vlaneseq
          %v309 = vshrl.u32 %v308, 7
          %v310 = vsub.s32 0, %v309
          %v311 = vrot.slane %v305, %v310
          %v312 = vlaneseq
          %v313 = vshrl.u32 %v312, 7
          %v314 = vsub.s32 1, %v313
          %v315 = vrot.slane %v305, %v314
          %v318 = vmul.f32 %v303, %v311
          %v319 = vmul.f32 %v299, %v315
          %v320 = vstv %s306
          %v321 = vmul.f32 %v320, %v318
          %v322 = vmul.f32 %v320, %v319
          %v323 = vadd.f32 %v321, 0.0
          %v324 = vadd.f32 %v322, 0.0
          %s325 = sld [smem:[#allocation3 + $0x80]]
          %326 = vrot.lane.b32.xlu0 %v311, 16
          %v327 = vpop.permute.xlu0 %326
          %328 = vrot.lane.b32.xlu0 %v315, 16
          %v329 = vpop.permute.xlu0 %328
          %vm330 = vcmask 130048
          %v331 = vsel %vm330, %v327, %v329
          %v335 = vmul.f32 %v303, %v327
          %v336 = vmul.f32 %v299, %v331
          %v337 = vmul.f32 %v304, %v329
          %v338 = vstv %s325
          %v339 = vmul.f32 %v338, %v335
          %v340 = vmul.f32 %v338, %v336
          %v341 = vmul.f32 %v338, %v337
          %345 = vrot.lane.b32.xlu0 %v339, 112
          %v346 = vpop.permute.xlu0 %345
          %347 = vrot.lane.b32.xlu0 %v340, 112
          %v348 = vpop.permute.xlu0 %347
          %349 = vrot.lane.b32.xlu0 %v341, 112
          %v350 = vpop.permute.xlu0 %349
          %vm351 = vcmask 916480
          %v352 = vsel %vm351, %v346, %v348
          %v353 = vsel %vm351, %v348, %v350
          %v356 = vadd.f32 %v323, %v352
          %v357 = vadd.f32 %v324, %v353
          %s358 = sld [smem:[#allocation3 + $0x100]]
          %359 = vrot.lane.b32.xlu0 %v311, 32
          %v360 = vpop.permute.xlu0 %359
          %361 = vrot.lane.b32.xlu0 %v315, 32
          %v362 = vpop.permute.xlu0 %361
          %vm363 = vcmask 261120
          %v364 = vsel %vm363, %v360, %v362
          %v368 = vmul.f32 %v303, %v360
          %v369 = vmul.f32 %v299, %v364
          %v370 = vmul.f32 %v304, %v362
          %v371 = vstv %s358
          %v372 = vmul.f32 %v371, %v368
          %v373 = vmul.f32 %v371, %v369
          %v374 = vmul.f32 %v371, %v370
          %378 = vrot.lane.b32.xlu0 %v372, 96
          %v379 = vpop.permute.xlu0 %378
          %380 = vrot.lane.b32.xlu0 %v373, 96
          %v381 = vpop.permute.xlu0 %380
          %382 = vrot.lane.b32.xlu0 %v374, 96
          %v383 = vpop.permute.xlu0 %382
          %vm384 = vcmask 785408
          %v385 = vsel %vm384, %v379, %v381
          %v386 = vsel %vm384, %v381, %v383
          %v389 = vadd.f32 %v356, %v385
          %v390 = vadd.f32 %v357, %v386
          %s391 = sld [smem:[#allocation3 + $0x180]]
          %392 = vrot.lane.b32.xlu0 %v311, 48
          %v393 = vpop.permute.xlu0 %392
          %394 = vrot.lane.b32.xlu0 %v315, 48
          %v395 = vpop.permute.xlu0 %394
          %vm396 = vcmask 392192
          %v397 = vsel %vm396, %v393, %v395
          %v401 = vmul.f32 %v303, %v393
          %v402 = vmul.f32 %v299, %v397
          %v403 = vmul.f32 %v304, %v395
          %v404 = vstv %s391
          %v405 = vmul.f32 %v404, %v401
          %v406 = vmul.f32 %v404, %v402
          %v407 = vmul.f32 %v404, %v403
          %411 = vrot.lane.b32.xlu0 %v405, 80
          %v412 = vpop.permute.xlu0 %411
          %413 = vrot.lane.b32.xlu0 %v406, 80
          %v414 = vpop.permute.xlu0 %413
          %415 = vrot.lane.b32.xlu0 %v407, 80
          %v416 = vpop.permute.xlu0 %415
          %vm417 = vcmask 654336
          %v418 = vsel %vm417, %v412, %v414
          %v419 = vsel %vm417, %v414, %v416
          %v422 = vadd.f32 %v389, %v418
          %v423 = vadd.f32 %v390, %v419
          %s424 = sld [smem:[#allocation3 + $0x200]]
          %425 = vrot.lane.b32.xlu0 %v311, 64
          %v426 = vpop.permute.xlu0 %425
          %427 = vrot.lane.b32.xlu0 %v315, 64
          %v428 = vpop.permute.xlu0 %427
          %vm429 = vcmask 523264
          %v430 = vsel %vm429, %v426, %v428
          %v434 = vmul.f32 %v303, %v426
          %v435 = vmul.f32 %v299, %v430
          %v436 = vmul.f32 %v304, %v428
          %v437 = vstv %s424
          %v438 = vmul.f32 %v437, %v434
          %v439 = vmul.f32 %v437, %v435
          %v440 = vmul.f32 %v437, %v436
          %444 = vrot.lane.b32.xlu0 %v438, 64
          %v445 = vpop.permute.xlu0 %444
          %446 = vrot.lane.b32.xlu0 %v439, 64
          %v447 = vpop.permute.xlu0 %446
          %448 = vrot.lane.b32.xlu0 %v440, 64
          %v449 = vpop.permute.xlu0 %448
          %v450 = vsel %vm429, %v445, %v447
          %v451 = vsel %vm429, %v447, %v449
          %v454 = vadd.f32 %v422, %v450
          %v455 = vadd.f32 %v423, %v451
          %s456 = sld [smem:[#allocation3 + $0x280]]
          %457 = vrot.lane.b32.xlu0 %v311, 80
          %v458 = vpop.permute.xlu0 %457
          %459 = vrot.lane.b32.xlu0 %v315, 80
          %v460 = vpop.permute.xlu0 %459
          %v461 = vsel %vm417, %v458, %v460
          %v465 = vmul.f32 %v303, %v458
          %v466 = vmul.f32 %v299, %v461
          %v467 = vmul.f32 %v304, %v460
          %v468 = vstv %s456
          %v469 = vmul.f32 %v468, %v465
          %v470 = vmul.f32 %v468, %v466
          %v471 = vmul.f32 %v468, %v467
          %475 = vrot.lane.b32.xlu0 %v469, 48
          %v476 = vpop.permute.xlu0 %475
          %477 = vrot.lane.b32.xlu0 %v470, 48
          %v478 = vpop.permute.xlu0 %477
          %479 = vrot.lane.b32.xlu0 %v471, 48
          %v480 = vpop.permute.xlu0 %479
          %v481 = vsel %vm396, %v476, %v478
          %v482 = vsel %vm396, %v478, %v480
          %v485 = vadd.f32 %v454, %v481
          %v486 = vadd.f32 %v455, %v482
          %s487 = sld [smem:[#allocation3 + $0x300]]
          %488 = vrot.lane.b32.xlu0 %v311, 96
          %v489 = vpop.permute.xlu0 %488
          %490 = vrot.lane.b32.xlu0 %v315, 96
          %v491 = vpop.permute.xlu0 %490
          %v492 = vsel %vm384, %v489, %v491
          %v496 = vmul.f32 %v303, %v489
          %v497 = vmul.f32 %v299, %v492
          %v498 = vmul.f32 %v304, %v491
          %v499 = vstv %s487
          %v500 = vmul.f32 %v499, %v496
          %v501 = vmul.f32 %v499, %v497
          %v502 = vmul.f32 %v499, %v498
          %506 = vrot.lane.b32.xlu0 %v500, 32
          %v507 = vpop.permute.xlu0 %506
          %508 = vrot.lane.b32.xlu0 %v501, 32
          %v509 = vpop.permute.xlu0 %508
          %510 = vrot.lane.b32.xlu0 %v502, 32
          %v511 = vpop.permute.xlu0 %510
          %v512 = vsel %vm363, %v507, %v509
          %v513 = vsel %vm363, %v509, %v511
          %v516 = vadd.f32 %v485, %v512
          %v517 = vadd.f32 %v486, %v513
          %s518 = scalar_lea.vmem [#allocation7], 1
          %v519 = vld [vmem:[%s518] ss:$8 sm:$0x3]
          %s520 = sld [smem:[#allocation3 + $0x1]]
          %v522 = vlaneseq
          %v523 = vshrl.u32 %v522, 7
          %v524 = vsub.s32 0, %v523
          %v525 = vrot.slane %v519, %v524
          %v526 = vlaneseq
          %v527 = vshrl.u32 %v526, 7
          %v528 = vsub.s32 1, %v527
          %v529 = vrot.slane %v519, %v528
          %530 = vrot.lane.b32.xlu0 %v525, 1
          %v531 = vpop.permute.xlu0 %530
          %532 = vrot.lane.b32.xlu0 %v529, 1
          %v533 = vpop.permute.xlu0 %532
          %vm534 = vcmask 7168
          %v535 = vsel %vm534, %v531, %v533
          %v539 = vmul.f32 %v303, %v531
          %v540 = vmul.f32 %v299, %v535
          %v541 = vmul.f32 %v304, %v533
          %v542 = vstv %s520
          %v543 = vmul.f32 %v542, %v539
          %v544 = vmul.f32 %v542, %v540
          %v545 = vmul.f32 %v542, %v541
          %549 = vrot.lane.b32.xlu0 %v543, 127
          %v550 = vpop.permute.xlu0 %549
          %551 = vrot.lane.b32.xlu0 %v544, 127
          %v552 = vpop.permute.xlu0 %551
          %553 = vrot.lane.b32.xlu0 %v545, 127
          %v554 = vpop.permute.xlu0 %553
          %vm555 = vcmask 1039360
          %v556 = vsel %vm555, %v550, %v552
          %v557 = vsel %vm555, %v552, %v554
          %v560 = vadd.f32 %v516, %v556
          %v561 = vadd.f32 %v517, %v557
          %s562 = sld [smem:[#allocation3 + $0x81]]
          %563 = vrot.lane.b32.xlu0 %v525, 17
          %v564 = vpop.permute.xlu0 %563
          %565 = vrot.lane.b32.xlu0 %v529, 17
          %v566 = vpop.permute.xlu0 %565
          %vm567 = vcmask 138240
          %v568 = vsel %vm567, %v564, %v566
          %v572 = vmul.f32 %v303, %v564
          %v573 = vmul.f32 %v299, %v568
          %v574 = vmul.f32 %v304, %v566
          %v575 = vstv %s562
          %v576 = vmul.f32 %v575, %v572
          %v577 = vmul.f32 %v575, %v573
          %v578 = vmul.f32 %v575, %v574
          %582 = vrot.lane.b32.xlu0 %v576, 111
          %v583 = vpop.permute.xlu0 %582
          %584 = vrot.lane.b32.xlu0 %v577, 111
          %v585 = vpop.permute.xlu0 %584
          %586 = vrot.lane.b32.xlu0 %v578, 111
          %v587 = vpop.permute.xlu0 %586
          %vm588 = vcmask 908288
          %v589 = vsel %vm588, %v583, %v585
          %v590 = vsel %vm588, %v585, %v587
          %v593 = vadd.f32 %v560, %v589
          %v594 = vadd.f32 %v561, %v590
          %s595 = sld [smem:[#allocation3 + $0x101]]
          %596 = vrot.lane.b32.xlu0 %v525, 33
          %v597 = vpop.permute.xlu0 %596
          %598 = vrot.lane.b32.xlu0 %v529, 33
          %v599 = vpop.permute.xlu0 %598
          %vm600 = vcmask 269312
          %v601 = vsel %vm600, %v597, %v599
          %v605 = vmul.f32 %v303, %v597
          %v606 = vmul.f32 %v299, %v601
          %v607 = vmul.f32 %v304, %v599
          %v608 = vstv %s595
          %v609 = vmul.f32 %v608, %v605
          %v610 = vmul.f32 %v608, %v606
          %v611 = vmul.f32 %v608, %v607
          %615 = vrot.lane.b32.xlu0 %v609, 95
          %v616 = vpop.permute.xlu0 %615
          %617 = vrot.lane.b32.xlu0 %v610, 95
          %v618 = vpop.permute.xlu0 %617
          %619 = vrot.lane.b32.xlu0 %v611, 95
          %v620 = vpop.permute.xlu0 %619
          %vm621 = vcmask 777216
          %v622 = vsel %vm621, %v616, %v618
          %v623 = vsel %vm621, %v618, %v620
          %v626 = vadd.f32 %v593, %v622
          %v627 = vadd.f32 %v594, %v623
          %s628 = sld [smem:[#allocation3 + $0x181]]
          %629 = vrot.lane.b32.xlu0 %v525, 49
          %v630 = vpop.permute.xlu0 %629
          %631 = vrot.lane.b32.xlu0 %v529, 49
          %v632 = vpop.permute.xlu0 %631
          %vm633 = vcmask 400384
          %v634 = vsel %vm633, %v630, %v632
          %v638 = vmul.f32 %v303, %v630
          %v639 = vmul.f32 %v299, %v634
          %v640 = vmul.f32 %v304, %v632
          %v641 = vstv %s628
          %v642 = vmul.f32 %v641, %v638
          %v643 = vmul.f32 %v641, %v639
          %v644 = vmul.f32 %v641, %v640
          %648 = vrot.lane.b32.xlu0 %v642, 79
          %v649 = vpop.permute.xlu0 %648
          %650 = vrot.lane.b32.xlu0 %v643, 79
          %v651 = vpop.permute.xlu0 %650
          %652 = vrot.lane.b32.xlu0 %v644, 79
          %v653 = vpop.permute.xlu0 %652
          %vm654 = vcmask 646144
          %v655 = vsel %vm654, %v649, %v651
          %v656 = vsel %vm654, %v651, %v653
          %v659 = vadd.f32 %v626, %v655
          %v660 = vadd.f32 %v627, %v656
          %s661 = sld [smem:[#allocation3 + $0x201]]
          %662 = vrot.lane.b32.xlu0 %v525, 65
          %v663 = vpop.permute.xlu0 %662
          %664 = vrot.lane.b32.xlu0 %v529, 65
          %v665 = vpop.permute.xlu0 %664
          %vm666 = vcmask 531456
          %v667 = vsel %vm666, %v663, %v665
          %v671 = vmul.f32 %v303, %v663
          %v672 = vmul.f32 %v299, %v667
          %v673 = vmul.f32 %v304, %v665
          %v674 = vstv %s661
          %v675 = vmul.f32 %v674, %v671
          %v676 = vmul.f32 %v674, %v672
          %v677 = vmul.f32 %v674, %v673
          %681 = vrot.lane.b32.xlu0 %v675, 63
          %v682 = vpop.permute.xlu0 %681
          %683 = vrot.lane.b32.xlu0 %v676, 63
          %v684 = vpop.permute.xlu0 %683
          %685 = vrot.lane.b32.xlu0 %v677, 63
          %v686 = vpop.permute.xlu0 %685
          %vm687 = vcmask 515072
          %v688 = vsel %vm687, %v682, %v684
          %v689 = vsel %vm687, %v684, %v686
          %v692 = vadd.f32 %v659, %v688
          %v693 = vadd.f32 %v660, %v689
          %s694 = sld [smem:[#allocation3 + $0x281]]
          %695 = vrot.lane.b32.xlu0 %v525, 81
          %v696 = vpop.permute.xlu0 %695
          %697 = vrot.lane.b32.xlu0 %v529, 81
          %v698 = vpop.permute.xlu0 %697
          %vm699 = vcmask 662528
          %v700 = vsel %vm699, %v696, %v698
          %v704 = vmul.f32 %v303, %v696
          %v705 = vmul.f32 %v299, %v700
          %v706 = vmul.f32 %v304, %v698
          %v707 = vstv %s694
          %v708 = vmul.f32 %v707, %v704
          %v709 = vmul.f32 %v707, %v705
          %v710 = vmul.f32 %v707, %v706
          %714 = vrot.lane.b32.xlu0 %v708, 47
          %v715 = vpop.permute.xlu0 %714
          %716 = vrot.lane.b32.xlu0 %v709, 47
          %v717 = vpop.permute.xlu0 %716
          %718 = vrot.lane.b32.xlu0 %v710, 47
          %v719 = vpop.permute.xlu0 %718
          %vm720 = vcmask 384000
          %v721 = vsel %vm720, %v715, %v717
          %v722 = vsel %vm720, %v717, %v719
          %v725 = vadd.f32 %v692, %v721
          %v726 = vadd.f32 %v693, %v722
          %s727 = sld [smem:[#allocation3 + $0x301]]
          %728 = vrot.lane.b32.xlu0 %v525, 97
          %v729 = vpop.permute.xlu0 %728
          %730 = vrot.lane.b32.xlu0 %v529, 97
          %v731 = vpop.permute.xlu0 %730
          %vm732 = vcmask 793600
          %v733 = vsel %vm732, %v729, %v731
          %v737 = vmul.f32 %v303, %v729
          %v738 = vmul.f32 %v299, %v733
          %v739 = vmul.f32 %v304, %v731
          %v740 = vstv %s727
          %v741 = vmul.f32 %v740, %v737
          %v742 = vmul.f32 %v740, %v738
          %v743 = vmul.f32 %v740, %v739
          %747 = vrot.lane.b32.xlu0 %v741, 31
          %v748 = vpop.permute.xlu0 %747
          %749 = vrot.lane.b32.xlu0 %v742, 31
          %v750 = vpop.permute.xlu0 %749
          %751 = vrot.lane.b32.xlu0 %v743, 31
          %v752 = vpop.permute.xlu0 %751
          %vm753 = vcmask 252928
          %v754 = vsel %vm753, %v748, %v750
          %v755 = vsel %vm753, %v750, %v752
          %v758 = vadd.f32 %v725, %v754
          %v759 = vadd.f32 %v726, %v755
          %s760 = scalar_lea.vmem [#allocation7], 2
          %v761 = vld [vmem:[%s760] ss:$8 sm:$0x3]
          %s762 = sld [smem:[#allocation3 + $0x2]]
          %v764 = vlaneseq
          %v765 = vshrl.u32 %v764, 7
          %v766 = vsub.s32 0, %v765
          %v767 = vrot.slane %v761, %v766
          %v768 = vlaneseq
          %v769 = vshrl.u32 %v768, 7
          %v770 = vsub.s32 1, %v769
          %v771 = vrot.slane %v761, %v770
          %772 = vrot.lane.b32.xlu0 %v767, 2
          %v773 = vpop.permute.xlu0 %772
          %774 = vrot.lane.b32.xlu0 %v771, 2
          %v775 = vpop.permute.xlu0 %774
          %vm776 = vcmask 15360
          %v777 = vsel %vm776, %v773, %v775
          %v781 = vmul.f32 %v303, %v773
          %v782 = vmul.f32 %v299, %v777
          %v783 = vmul.f32 %v304, %v775
          %v784 = vstv %s762
          %v785 = vmul.f32 %v784, %v781
          %v786 = vmul.f32 %v784, %v782
          %v787 = vmul.f32 %v784, %v783
          %791 = vrot.lane.b32.xlu0 %v785, 126
          %v792 = vpop.permute.xlu0 %791
          %793 = vrot.lane.b32.xlu0 %v786, 126
          %v794 = vpop.permute.xlu0 %793
          %795 = vrot.lane.b32.xlu0 %v787, 126
          %v796 = vpop.permute.xlu0 %795
          %vm797 = vcmask 1031168
          %v798 = vsel %vm797, %v792, %v794
          %v799 = vsel %vm797, %v794, %v796
          %v802 = vadd.f32 %v758, %v798
          %v803 = vadd.f32 %v759, %v799
          %s804 = sld [smem:[#allocation3 + $0x82]]
          %805 = vrot.lane.b32.xlu0 %v767, 18
          %v806 = vpop.permute.xlu0 %805
          %807 = vrot.lane.b32.xlu0 %v771, 18
          %v808 = vpop.permute.xlu0 %807
          %vm809 = vcmask 146432
          %v810 = vsel %vm809, %v806, %v808
          %v814 = vmul.f32 %v303, %v806
          %v815 = vmul.f32 %v299, %v810
          %v816 = vmul.f32 %v304, %v808
          %v817 = vstv %s804
          %v818 = vmul.f32 %v817, %v814
          %v819 = vmul.f32 %v817, %v815
          %v820 = vmul.f32 %v817, %v816
          %824 = vrot.lane.b32.xlu0 %v818, 110
          %v825 = vpop.permute.xlu0 %824
          %826 = vrot.lane.b32.xlu0 %v819, 110
          %v827 = vpop.permute.xlu0 %826
          %828 = vrot.lane.b32.xlu0 %v820, 110
          %v829 = vpop.permute.xlu0 %828
          %vm830 = vcmask 900096
          %v831 = vsel %vm830, %v825, %v827
          %v832 = vsel %vm830, %v827, %v829
          %v835 = vadd.f32 %v802, %v831
          %v836 = vadd.f32 %v803, %v832
          %s837 = sld [smem:[#allocation3 + $0x102]]
          %838 = vrot.lane.b32.xlu0 %v767, 34
          %v839 = vpop.permute.xlu0 %838
          %840 = vrot.lane.b32.xlu0 %v771, 34
          %v841 = vpop.permute.xlu0 %840
          %vm842 = vcmask 277504
          %v843 = vsel %vm842, %v839, %v841
          %v847 = vmul.f32 %v303, %v839
          %v848 = vmul.f32 %v299, %v843
          %v849 = vmul.f32 %v304, %v841
          %v850 = vstv %s837
          %v851 = vmul.f32 %v850, %v847
          %v852 = vmul.f32 %v850, %v848
          %v853 = vmul.f32 %v850, %v849
          %857 = vrot.lane.b32.xlu0 %v851, 94
          %v858 = vpop.permute.xlu0 %857
          %859 = vrot.lane.b32.xlu0 %v852, 94
          %v860 = vpop.permute.xlu0 %859
          %861 = vrot.lane.b32.xlu0 %v853, 94
          %v862 = vpop.permute.xlu0 %861
          %vm863 = vcmask 769024
          %v864 = vsel %vm863, %v858, %v860
          %v865 = vsel %vm863, %v860, %v862
          %v868 = vadd.f32 %v835, %v864
          %v869 = vadd.f32 %v836, %v865
          %s870 = sld [smem:[#allocation3 + $0x182]]
          %871 = vrot.lane.b32.xlu0 %v767, 50
          %v872 = vpop.permute.xlu0 %871
          %873 = vrot.lane.b32.xlu0 %v771, 50
          %v874 = vpop.permute.xlu0 %873
          %vm875 = vcmask 408576
          %v876 = vsel %vm875, %v872, %v874
          %v880 = vmul.f32 %v303, %v872
          %v881 = vmul.f32 %v299, %v876
          %v882 = vmul.f32 %v304, %v874
          %v883 = vstv %s870
          %v884 = vmul.f32 %v883, %v880
          %v885 = vmul.f32 %v883, %v881
          %v886 = vmul.f32 %v883, %v882
          %890 = vrot.lane.b32.xlu0 %v884, 78
          %v891 = vpop.permute.xlu0 %890
          %892 = vrot.lane.b32.xlu0 %v885, 78
          %v893 = vpop.permute.xlu0 %892
          %894 = vrot.lane.b32.xlu0 %v886, 78
          %v895 = vpop.permute.xlu0 %894
          %vm896 = vcmask 637952
          %v897 = vsel %vm896, %v891, %v893
          %v898 = vsel %vm896, %v893, %v895
          %v901 = vadd.f32 %v868, %v897
          %v902 = vadd.f32 %v869, %v898
          %s903 = sld [smem:[#allocation3 + $0x202]]
          %904 = vrot.lane.b32.xlu0 %v767, 66
          %v905 = vpop.permute.xlu0 %904
          %906 = vrot.lane.b32.xlu0 %v771, 66
          %v907 = vpop.permute.xlu0 %906
          %vm908 = vcmask 539648
          %v909 = vsel %vm908, %v905, %v907
          %v913 = vmul.f32 %v303, %v905
          %v914 = vmul.f32 %v299, %v909
          %v915 = vmul.f32 %v304, %v907
          %v916 = vstv %s903
          %v917 = vmul.f32 %v916, %v913
          %v918 = vmul.f32 %v916, %v914
          %v919 = vmul.f32 %v916, %v915
          %923 = vrot.lane.b32.xlu0 %v917, 62
          %v924 = vpop.permute.xlu0 %923
          %925 = vrot.lane.b32.xlu0 %v918, 62
          %v926 = vpop.permute.xlu0 %925
          %927 = vrot.lane.b32.xlu0 %v919, 62
          %v928 = vpop.permute.xlu0 %927
          %vm929 = vcmask 506880
          %v930 = vsel %vm929, %v924, %v926
          %v931 = vsel %vm929, %v926, %v928
          %v934 = vadd.f32 %v901, %v930
          %v935 = vadd.f32 %v902, %v931
          %s936 = sld [smem:[#allocation3 + $0x282]]
          %937 = vrot.lane.b32.xlu0 %v767, 82
          %v938 = vpop.permute.xlu0 %937
          %939 = vrot.lane.b32.xlu0 %v771, 82
          %v940 = vpop.permute.xlu0 %939
          %vm941 = vcmask 670720
          %v942 = vsel %vm941, %v938, %v940
          %v946 = vmul.f32 %v303, %v938
          %v947 = vmul.f32 %v299, %v942
          %v948 = vmul.f32 %v304, %v940
          %v949 = vstv %s936
          %v950 = vmul.f32 %v949, %v946
          %v951 = vmul.f32 %v949, %v947
          %v952 = vmul.f32 %v949, %v948
          %956 = vrot.lane.b32.xlu0 %v950, 46
          %v957 = vpop.permute.xlu0 %956
          %958 = vrot.lane.b32.xlu0 %v951, 46
          %v959 = vpop.permute.xlu0 %958
          %960 = vrot.lane.b32.xlu0 %v952, 46
          %v961 = vpop.permute.xlu0 %960
          %vm962 = vcmask 375808
          %v963 = vsel %vm962, %v957, %v959
          %v964 = vsel %vm962, %v959, %v961
          %v967 = vadd.f32 %v934, %v963
          %v968 = vadd.f32 %v935, %v964
          %s969 = sld [smem:[#allocation3 + $0x302]]
          %970 = vrot.lane.b32.xlu0 %v767, 98
          %v971 = vpop.permute.xlu0 %970
          %972 = vrot.lane.b32.xlu0 %v771, 98
          %v973 = vpop.permute.xlu0 %972
          %vm974 = vcmask 801792
          %v975 = vsel %vm974, %v971, %v973
          %v979 = vmul.f32 %v303, %v971
          %v980 = vmul.f32 %v299, %v975
          %v981 = vmul.f32 %v304, %v973
          %v982 = vstv %s969
          %v983 = vmul.f32 %v982, %v979
          %v984 = vmul.f32 %v982, %v980
          %v985 = vmul.f32 %v982, %v981
          %989 = vrot.lane.b32.xlu0 %v983, 30
          %v990 = vpop.permute.xlu0 %989
          %991 = vrot.lane.b32.xlu0 %v984, 30
          %v992 = vpop.permute.xlu0 %991
          %993 = vrot.lane.b32.xlu0 %v985, 30
          %v994 = vpop.permute.xlu0 %993
          %vm995 = vcmask 244736
          %v996 = vsel %vm995, %v990, %v992
          %v997 = vsel %vm995, %v992, %v994
          %v1000 = vadd.f32 %v967, %v996
          %v1001 = vadd.f32 %v968, %v997
          %s1002 = scalar_lea.vmem [#allocation7], 3
          %v1003 = vld [vmem:[%s1002] ss:$8 sm:$0x3]
          %s1004 = sld [smem:[#allocation3 + $0x3]]
          %v1006 = vlaneseq
          %v1007 = vshrl.u32 %v1006, 7
          %v1008 = vsub.s32 0, %v1007
          %v1009 = vrot.slane %v1003, %v1008
          %v1010 = vlaneseq
          %v1011 = vshrl.u32 %v1010, 7
          %v1012 = vsub.s32 1, %v1011
          %v1013 = vrot.slane %v1003, %v1012
          %1014 = vrot.lane.b32.xlu0 %v1009, 3
          %v1015 = vpop.permute.xlu0 %1014
          %1016 = vrot.lane.b32.xlu0 %v1013, 3
          %v1017 = vpop.permute.xlu0 %1016
          %vm1018 = vcmask 23552
          %v1019 = vsel %vm1018, %v1015, %v1017
          %v1023 = vmul.f32 %v303, %v1015
          %v1024 = vmul.f32 %v299, %v1019
          %v1025 = vmul.f32 %v304, %v1017
          %v1026 = vstv %s1004
          %v1027 = vmul.f32 %v1026, %v1023
          %v1028 = vmul.f32 %v1026, %v1024
          %v1029 = vmul.f32 %v1026, %v1025
          %1033 = vrot.lane.b32.xlu0 %v1027, 125
          %v1034 = vpop.permute.xlu0 %1033
          %1035 = vrot.lane.b32.xlu0 %v1028, 125
          %v1036 = vpop.permute.xlu0 %1035
          %1037 = vrot.lane.b32.xlu0 %v1029, 125
          %v1038 = vpop.permute.xlu0 %1037
          %vm1039 = vcmask 1022976
          %v1040 = vsel %vm1039, %v1034, %v1036
          %v1041 = vsel %vm1039, %v1036, %v1038
          %v1044 = vadd.f32 %v1000, %v1040
          %v1045 = vadd.f32 %v1001, %v1041
          %s1046 = sld [smem:[#allocation3 + $0x83]]
          %1047 = vrot.lane.b32.xlu0 %v1009, 19
          %v1048 = vpop.permute.xlu0 %1047
          %1049 = vrot.lane.b32.xlu0 %v1013, 19
          %v1050 = vpop.permute.xlu0 %1049
          %vm1051 = vcmask 154624
          %v1052 = vsel %vm1051, %v1048, %v1050
          %v1056 = vmul.f32 %v303, %v1048
          %v1057 = vmul.f32 %v299, %v1052
          %v1058 = vmul.f32 %v304, %v1050
          %v1059 = vstv %s1046
          %v1060 = vmul.f32 %v1059, %v1056
          %v1061 = vmul.f32 %v1059, %v1057
          %v1062 = vmul.f32 %v1059, %v1058
          %1066 = vrot.lane.b32.xlu0 %v1060, 109
          %v1067 = vpop.permute.xlu0 %1066
          %1068 = vrot.lane.b32.xlu0 %v1061, 109
          %v1069 = vpop.permute.xlu0 %1068
          %1070 = vrot.lane.b32.xlu0 %v1062, 109
          %v1071 = vpop.permute.xlu0 %1070
          %vm1072 = vcmask 891904
          %v1073 = vsel %vm1072, %v1067, %v1069
          %v1074 = vsel %vm1072, %v1069, %v1071
          %v1077 = vadd.f32 %v1044, %v1073
          %v1078 = vadd.f32 %v1045, %v1074
          %s1079 = sld [smem:[#allocation3 + $0x103]]
          %1080 = vrot.lane.b32.xlu0 %v1009, 35
          %v1081 = vpop.permute.xlu0 %1080
          %1082 = vrot.lane.b32.xlu0 %v1013, 35
          %v1083 = vpop.permute.xlu0 %1082
          %vm1084 = vcmask 285696
          %v1085 = vsel %vm1084, %v1081, %v1083
          %v1089 = vmul.f32 %v303, %v1081
          %v1090 = vmul.f32 %v299, %v1085
          %v1091 = vmul.f32 %v304, %v1083
          %v1092 = vstv %s1079
          %v1093 = vmul.f32 %v1092, %v1089
          %v1094 = vmul.f32 %v1092, %v1090
          %v1095 = vmul.f32 %v1092, %v1091
          %1099 = vrot.lane.b32.xlu0 %v1093, 93
          %v1100 = vpop.permute.xlu0 %1099
          %1101 = vrot.lane.b32.xlu0 %v1094, 93
          %v1102 = vpop.permute.xlu0 %1101
          %1103 = vrot.lane.b32.xlu0 %v1095, 93
          %v1104 = vpop.permute.xlu0 %1103
          %vm1105 = vcmask 760832
          %v1106 = vsel %vm1105, %v1100, %v1102
          %v1107 = vsel %vm1105, %v1102, %v1104
          %v1110 = vadd.f32 %v1077, %v1106
          %v1111 = vadd.f32 %v1078, %v1107
          %s1112 = sld [smem:[#allocation3 + $0x183]]
          %1113 = vrot.lane.b32.xlu0 %v1009, 51
          %v1114 = vpop.permute.xlu0 %1113
          %1115 = vrot.lane.b32.xlu0 %v1013, 51
          %v1116 = vpop.permute.xlu0 %1115
          %v1117 = vsel %vm298, %v1114, %v1116
          %v1121 = vmul.f32 %v303, %v1114
          %v1122 = vmul.f32 %v299, %v1117
          %v1123 = vmul.f32 %v304, %v1116
          %v1124 = vstv %s1112
          %v1125 = vmul.f32 %v1124, %v1121
          %v1126 = vmul.f32 %v1124, %v1122
          %v1127 = vmul.f32 %v1124, %v1123
          %1131 = vrot.lane.b32.xlu0 %v1125, 77
          %v1132 = vpop.permute.xlu0 %1131
          %1133 = vrot.lane.b32.xlu0 %v1126, 77
          %v1134 = vpop.permute.xlu0 %1133
          %1135 = vrot.lane.b32.xlu0 %v1127, 77
          %v1136 = vpop.permute.xlu0 %1135
          %vm1137 = vcmask 629760
          %v1138 = vsel %vm1137, %v1132, %v1134
          %v1139 = vsel %vm1137, %v1134, %v1136
          %v1142 = vadd.f32 %v1110, %v1138
          %v1143 = vadd.f32 %v1111, %v1139
          %s1144 = sld [smem:[#allocation3 + $0x203]]
          %1145 = vrot.lane.b32.xlu0 %v1009, 67
          %v1146 = vpop.permute.xlu0 %1145
          %1147 = vrot.lane.b32.xlu0 %v1013, 67
          %v1148 = vpop.permute.xlu0 %1147
          %vm1149 = vcmask 547840
          %v1150 = vsel %vm1149, %v1146, %v1148
          %v1154 = vmul.f32 %v303, %v1146
          %v1155 = vmul.f32 %v299, %v1150
          %v1156 = vmul.f32 %v304, %v1148
          %v1157 = vstv %s1144
          %v1158 = vmul.f32 %v1157, %v1154
          %v1159 = vmul.f32 %v1157, %v1155
          %v1160 = vmul.f32 %v1157, %v1156
          %1164 = vrot.lane.b32.xlu0 %v1158, 61
          %v1165 = vpop.permute.xlu0 %1164
          %1166 = vrot.lane.b32.xlu0 %v1159, 61
          %v1167 = vpop.permute.xlu0 %1166
          %1168 = vrot.lane.b32.xlu0 %v1160, 61
          %v1169 = vpop.permute.xlu0 %1168
          %vm1170 = vcmask 498688
          %v1171 = vsel %vm1170, %v1165, %v1167
          %v1172 = vsel %vm1170, %v1167, %v1169
          %v1175 = vadd.f32 %v1142, %v1171
          %v1176 = vadd.f32 %v1143, %v1172
          %s1177 = sld [smem:[#allocation3 + $0x283]]
          %1178 = vrot.lane.b32.xlu0 %v1009, 83
          %v1179 = vpop.permute.xlu0 %1178
          %1180 = vrot.lane.b32.xlu0 %v1013, 83
          %v1181 = vpop.permute.xlu0 %1180
          %vm1182 = vcmask 678912
          %v1183 = vsel %vm1182, %v1179, %v1181
          %v1187 = vmul.f32 %v303, %v1179
          %v1188 = vmul.f32 %v299, %v1183
          %v1189 = vmul.f32 %v304, %v1181
          %v1190 = vstv %s1177
          %v1191 = vmul.f32 %v1190, %v1187
          %v1192 = vmul.f32 %v1190, %v1188
          %v1193 = vmul.f32 %v1190, %v1189
          %1197 = vrot.lane.b32.xlu0 %v1191, 45
          %v1198 = vpop.permute.xlu0 %1197
          %1199 = vrot.lane.b32.xlu0 %v1192, 45
          %v1200 = vpop.permute.xlu0 %1199
          %1201 = vrot.lane.b32.xlu0 %v1193, 45
          %v1202 = vpop.permute.xlu0 %1201
          %vm1203 = vcmask 367616
          %v1204 = vsel %vm1203, %v1198, %v1200
          %v1205 = vsel %vm1203, %v1200, %v1202
          %v1208 = vadd.f32 %v1175, %v1204
          %v1209 = vadd.f32 %v1176, %v1205
          %s1210 = sld [smem:[#allocation3 + $0x303]]
          %1211 = vrot.lane.b32.xlu0 %v1009, 99
          %v1212 = vpop.permute.xlu0 %1211
          %1213 = vrot.lane.b32.xlu0 %v1013, 99
          %v1214 = vpop.permute.xlu0 %1213
          %vm1215 = vcmask 809984
          %v1216 = vsel %vm1215, %v1212, %v1214
          %v1220 = vmul.f32 %v303, %v1212
          %v1221 = vmul.f32 %v299, %v1216
          %v1222 = vmul.f32 %v304, %v1214
          %v1223 = vstv %s1210
          %v1224 = vmul.f32 %v1223, %v1220
          %v1225 = vmul.f32 %v1223, %v1221
          %v1226 = vmul.f32 %v1223, %v1222
          %1230 = vrot.lane.b32.xlu0 %v1224, 29
          %v1231 = vpop.permute.xlu0 %1230
          %1232 = vrot.lane.b32.xlu0 %v1225, 29
          %v1233 = vpop.permute.xlu0 %1232
          %1234 = vrot.lane.b32.xlu0 %v1226, 29
          %v1235 = vpop.permute.xlu0 %1234
          %vm1236 = vcmask 236544
          %v1237 = vsel %vm1236, %v1231, %v1233
          %v1238 = vsel %vm1236, %v1233, %v1235
          %v1241 = vadd.f32 %v1208, %v1237
          %v1242 = vadd.f32 %v1209, %v1238
          %s1243 = scalar_lea.vmem [#allocation7], 4
          %v1244 = vld [vmem:[%s1243] ss:$8 sm:$0x3]
          %s1245 = sld [smem:[#allocation3 + $0x4]]
          %v1247 = vlaneseq
          %v1248 = vshrl.u32 %v1247, 7
          %v1249 = vsub.s32 0, %v1248
          %v1250 = vrot.slane %v1244, %v1249
          %v1251 = vlaneseq
          %v1252 = vshrl.u32 %v1251, 7
          %v1253 = vsub.s32 1, %v1252
          %v1254 = vrot.slane %v1244, %v1253
          %1255 = vrot.lane.b32.xlu0 %v1250, 4
          %v1256 = vpop.permute.xlu0 %1255
          %1257 = vrot.lane.b32.xlu0 %v1254, 4
          %v1258 = vpop.permute.xlu0 %1257
          %vm1259 = vcmask 31744
          %v1260 = vsel %vm1259, %v1256, %v1258
          %v1264 = vmul.f32 %v303, %v1256
          %v1265 = vmul.f32 %v299, %v1260
          %v1266 = vmul.f32 %v304, %v1258
          %v1267 = vstv %s1245
          %v1268 = vmul.f32 %v1267, %v1264
          %v1269 = vmul.f32 %v1267, %v1265
          %v1270 = vmul.f32 %v1267, %v1266
          %1274 = vrot.lane.b32.xlu0 %v1268, 124
          %v1275 = vpop.permute.xlu0 %1274
          %1276 = vrot.lane.b32.xlu0 %v1269, 124
          %v1277 = vpop.permute.xlu0 %1276
          %1278 = vrot.lane.b32.xlu0 %v1270, 124
          %v1279 = vpop.permute.xlu0 %1278
          %vm1280 = vcmask 1014784
          %v1281 = vsel %vm1280, %v1275, %v1277
          %v1282 = vsel %vm1280, %v1277, %v1279
          %v1285 = vadd.f32 %v1241, %v1281
          %v1286 = vadd.f32 %v1242, %v1282
          %s1287 = sld [smem:[#allocation3 + $0x84]]
          %1288 = vrot.lane.b32.xlu0 %v1250, 20
          %v1289 = vpop.permute.xlu0 %1288
          %1290 = vrot.lane.b32.xlu0 %v1254, 20
          %v1291 = vpop.permute.xlu0 %1290
          %vm1292 = vcmask 162816
          %v1293 = vsel %vm1292, %v1289, %v1291
          %v1297 = vmul.f32 %v303, %v1289
          %v1298 = vmul.f32 %v299, %v1293
          %v1299 = vmul.f32 %v304, %v1291
          %v1300 = vstv %s1287
          %v1301 = vmul.f32 %v1300, %v1297
          %v1302 = vmul.f32 %v1300, %v1298
          %v1303 = vmul.f32 %v1300, %v1299
          %1307 = vrot.lane.b32.xlu0 %v1301, 108
          %v1308 = vpop.permute.xlu0 %1307
          %1309 = vrot.lane.b32.xlu0 %v1302, 108
          %v1310 = vpop.permute.xlu0 %1309
          %1311 = vrot.lane.b32.xlu0 %v1303, 108
          %v1312 = vpop.permute.xlu0 %1311
          %vm1313 = vcmask 883712
          %v1314 = vsel %vm1313, %v1308, %v1310
          %v1315 = vsel %vm1313, %v1310, %v1312
          %v1318 = vadd.f32 %v1285, %v1314
          %v1319 = vadd.f32 %v1286, %v1315
          %s1320 = sld [smem:[#allocation3 + $0x104]]
          %1321 = vrot.lane.b32.xlu0 %v1250, 36
          %v1322 = vpop.permute.xlu0 %1321
          %1323 = vrot.lane.b32.xlu0 %v1254, 36
          %v1324 = vpop.permute.xlu0 %1323
          %vm1325 = vcmask 293888
          %v1326 = vsel %vm1325, %v1322, %v1324
          %v1330 = vmul.f32 %v303, %v1322
          %v1331 = vmul.f32 %v299, %v1326
          %v1332 = vmul.f32 %v304, %v1324
          %v1333 = vstv %s1320
          %v1334 = vmul.f32 %v1333, %v1330
          %v1335 = vmul.f32 %v1333, %v1331
          %v1336 = vmul.f32 %v1333, %v1332
          %1340 = vrot.lane.b32.xlu0 %v1334, 92
          %v1341 = vpop.permute.xlu0 %1340
          %1342 = vrot.lane.b32.xlu0 %v1335, 92
          %v1343 = vpop.permute.xlu0 %1342
          %1344 = vrot.lane.b32.xlu0 %v1336, 92
          %v1345 = vpop.permute.xlu0 %1344
          %vm1346 = vcmask 752640
          %v1347 = vsel %vm1346, %v1341, %v1343
          %v1348 = vsel %vm1346, %v1343, %v1345
          %v1351 = vadd.f32 %v1318, %v1347
          %v1352 = vadd.f32 %v1319, %v1348
          %s1353 = sld [smem:[#allocation3 + $0x184]]
          %1354 = vrot.lane.b32.xlu0 %v1250, 52
          %v1355 = vpop.permute.xlu0 %1354
          %1356 = vrot.lane.b32.xlu0 %v1254, 52
          %v1357 = vpop.permute.xlu0 %1356
          %vm1358 = vcmask 424960
          %v1359 = vsel %vm1358, %v1355, %v1357
          %v1363 = vmul.f32 %v303, %v1355
          %v1364 = vmul.f32 %v299, %v1359
          %v1365 = vmul.f32 %v304, %v1357
          %v1366 = vstv %s1353
          %v1367 = vmul.f32 %v1366, %v1363
          %v1368 = vmul.f32 %v1366, %v1364
          %v1369 = vmul.f32 %v1366, %v1365
          %1373 = vrot.lane.b32.xlu0 %v1367, 76
          %v1374 = vpop.permute.xlu0 %1373
          %1375 = vrot.lane.b32.xlu0 %v1368, 76
          %v1376 = vpop.permute.xlu0 %1375
          %1377 = vrot.lane.b32.xlu0 %v1369, 76
          %v1378 = vpop.permute.xlu0 %1377
          %vm1379 = vcmask 621568
          %v1380 = vsel %vm1379, %v1374, %v1376
          %v1381 = vsel %vm1379, %v1376, %v1378
          %v1384 = vadd.f32 %v1351, %v1380
          %v1385 = vadd.f32 %v1352, %v1381
          %s1386 = sld [smem:[#allocation3 + $0x204]]
          %1387 = vrot.lane.b32.xlu0 %v1250, 68
          %v1388 = vpop.permute.xlu0 %1387
          %1389 = vrot.lane.b32.xlu0 %v1254, 68
          %v1390 = vpop.permute.xlu0 %1389
          %vm1391 = vcmask 556032
          %v1392 = vsel %vm1391, %v1388, %v1390
          %v1396 = vmul.f32 %v303, %v1388
          %v1397 = vmul.f32 %v299, %v1392
          %v1398 = vmul.f32 %v304, %v1390
          %v1399 = vstv %s1386
          %v1400 = vmul.f32 %v1399, %v1396
          %v1401 = vmul.f32 %v1399, %v1397
          %v1402 = vmul.f32 %v1399, %v1398
          %1406 = vrot.lane.b32.xlu0 %v1400, 60
          %v1407 = vpop.permute.xlu0 %1406
          %1408 = vrot.lane.b32.xlu0 %v1401, 60
          %v1409 = vpop.permute.xlu0 %1408
          %1410 = vrot.lane.b32.xlu0 %v1402, 60
          %v1411 = vpop.permute.xlu0 %1410
          %vm1412 = vcmask 490496
          %v1413 = vsel %vm1412, %v1407, %v1409
          %v1414 = vsel %vm1412, %v1409, %v1411
          %v1417 = vadd.f32 %v1384, %v1413
          %v1418 = vadd.f32 %v1385, %v1414
          %s1419 = sld [smem:[#allocation3 + $0x284]]
          %1420 = vrot.lane.b32.xlu0 %v1250, 84
          %v1421 = vpop.permute.xlu0 %1420
          %1422 = vrot.lane.b32.xlu0 %v1254, 84
          %v1423 = vpop.permute.xlu0 %1422
          %vm1424 = vcmask 687104
          %v1425 = vsel %vm1424, %v1421, %v1423
          %v1429 = vmul.f32 %v303, %v1421
          %v1430 = vmul.f32 %v299, %v1425
          %v1431 = vmul.f32 %v304, %v1423
          %v1432 = vstv %s1419
          %v1433 = vmul.f32 %v1432, %v1429
          %v1434 = vmul.f32 %v1432, %v1430
          %v1435 = vmul.f32 %v1432, %v1431
          %1439 = vrot.lane.b32.xlu0 %v1433, 44
          %v1440 = vpop.permute.xlu0 %1439
          %1441 = vrot.lane.b32.xlu0 %v1434, 44
          %v1442 = vpop.permute.xlu0 %1441
          %1443 = vrot.lane.b32.xlu0 %v1435, 44
          %v1444 = vpop.permute.xlu0 %1443
          %vm1445 = vcmask 359424
          %v1446 = vsel %vm1445, %v1440, %v1442
          %v1447 = vsel %vm1445, %v1442, %v1444
          %v1450 = vadd.f32 %v1417, %v1446
          %v1451 = vadd.f32 %v1418, %v1447
          %s1452 = sld [smem:[#allocation3 + $0x304]]
          %1453 = vrot.lane.b32.xlu0 %v1250, 100
          %v1454 = vpop.permute.xlu0 %1453
          %1455 = vrot.lane.b32.xlu0 %v1254, 100
          %v1456 = vpop.permute.xlu0 %1455
          %vm1457 = vcmask 818176
          %v1458 = vsel %vm1457, %v1454, %v1456
          %v1462 = vmul.f32 %v303, %v1454
          %v1463 = vmul.f32 %v299, %v1458
          %v1464 = vmul.f32 %v304, %v1456
          %v1465 = vstv %s1452
          %v1466 = vmul.f32 %v1465, %v1462
          %v1467 = vmul.f32 %v1465, %v1463
          %v1468 = vmul.f32 %v1465, %v1464
          %1472 = vrot.lane.b32.xlu0 %v1466, 28
          %v1473 = vpop.permute.xlu0 %1472
          %1474 = vrot.lane.b32.xlu0 %v1467, 28
          %v1475 = vpop.permute.xlu0 %1474
          %1476 = vrot.lane.b32.xlu0 %v1468, 28
          %v1477 = vpop.permute.xlu0 %1476
          %vm1478 = vcmask 228352
          %v1479 = vsel %vm1478, %v1473, %v1475
          %v1480 = vsel %vm1478, %v1475, %v1477
          %v1483 = vadd.f32 %v1450, %v1479
          %v1484 = vadd.f32 %v1451, %v1480
          %s1485 = scalar_lea.vmem [#allocation7], 5
          %v1486 = vld [vmem:[%s1485] ss:$8 sm:$0x3]
          %s1487 = sld [smem:[#allocation3 + $0x5]]
          %v1489 = vlaneseq
          %v1490 = vshrl.u32 %v1489, 7
          %v1491 = vsub.s32 0, %v1490
          %v1492 = vrot.slane %v1486, %v1491
          %v1493 = vlaneseq
          %v1494 = vshrl.u32 %v1493, 7
          %v1495 = vsub.s32 1, %v1494
          %v1496 = vrot.slane %v1486, %v1495
          %1497 = vrot.lane.b32.xlu0 %v1492, 5
          %v1498 = vpop.permute.xlu0 %1497
          %1499 = vrot.lane.b32.xlu0 %v1496, 5
          %v1500 = vpop.permute.xlu0 %1499
          %vm1501 = vcmask 39936
          %v1502 = vsel %vm1501, %v1498, %v1500
          %v1506 = vmul.f32 %v303, %v1498
          %v1507 = vmul.f32 %v299, %v1502
          %v1508 = vmul.f32 %v304, %v1500
          %v1509 = vstv %s1487
          %v1510 = vmul.f32 %v1509, %v1506
          %v1511 = vmul.f32 %v1509, %v1507
          %v1512 = vmul.f32 %v1509, %v1508
          %1516 = vrot.lane.b32.xlu0 %v1510, 123
          %v1517 = vpop.permute.xlu0 %1516
          %1518 = vrot.lane.b32.xlu0 %v1511, 123
          %v1519 = vpop.permute.xlu0 %1518
          %1520 = vrot.lane.b32.xlu0 %v1512, 123
          %v1521 = vpop.permute.xlu0 %1520
          %vm1522 = vcmask 1006592
          %v1523 = vsel %vm1522, %v1517, %v1519
          %v1524 = vsel %vm1522, %v1519, %v1521
          %v1527 = vadd.f32 %v1483, %v1523
          %v1528 = vadd.f32 %v1484, %v1524
          %s1529 = sld [smem:[#allocation3 + $0x85]]
          %1530 = vrot.lane.b32.xlu0 %v1492, 21
          %v1531 = vpop.permute.xlu0 %1530
          %1532 = vrot.lane.b32.xlu0 %v1496, 21
          %v1533 = vpop.permute.xlu0 %1532
          %vm1534 = vcmask 171008
          %v1535 = vsel %vm1534, %v1531, %v1533
          %v1539 = vmul.f32 %v303, %v1531
          %v1540 = vmul.f32 %v299, %v1535
          %v1541 = vmul.f32 %v304, %v1533
          %v1542 = vstv %s1529
          %v1543 = vmul.f32 %v1542, %v1539
          %v1544 = vmul.f32 %v1542, %v1540
          %v1545 = vmul.f32 %v1542, %v1541
          %1549 = vrot.lane.b32.xlu0 %v1543, 107
          %v1550 = vpop.permute.xlu0 %1549
          %1551 = vrot.lane.b32.xlu0 %v1544, 107
          %v1552 = vpop.permute.xlu0 %1551
          %1553 = vrot.lane.b32.xlu0 %v1545, 107
          %v1554 = vpop.permute.xlu0 %1553
          %vm1555 = vcmask 875520
          %v1556 = vsel %vm1555, %v1550, %v1552
          %v1557 = vsel %vm1555, %v1552, %v1554
          %v1560 = vadd.f32 %v1527, %v1556
          %v1561 = vadd.f32 %v1528, %v1557
          %s1562 = sld [smem:[#allocation3 + $0x105]]
          %1563 = vrot.lane.b32.xlu0 %v1492, 37
          %v1564 = vpop.permute.xlu0 %1563
          %1565 = vrot.lane.b32.xlu0 %v1496, 37
          %v1566 = vpop.permute.xlu0 %1565
          %vm1567 = vcmask 302080
          %v1568 = vsel %vm1567, %v1564, %v1566
          %v1572 = vmul.f32 %v303, %v1564
          %v1573 = vmul.f32 %v299, %v1568
          %v1574 = vmul.f32 %v304, %v1566
          %v1575 = vstv %s1562
          %v1576 = vmul.f32 %v1575, %v1572
          %v1577 = vmul.f32 %v1575, %v1573
          %v1578 = vmul.f32 %v1575, %v1574
          %1582 = vrot.lane.b32.xlu0 %v1576, 91
          %v1583 = vpop.permute.xlu0 %1582
          %1584 = vrot.lane.b32.xlu0 %v1577, 91
          %v1585 = vpop.permute.xlu0 %1584
          %1586 = vrot.lane.b32.xlu0 %v1578, 91
          %v1587 = vpop.permute.xlu0 %1586
          %vm1588 = vcmask 744448
          %v1589 = vsel %vm1588, %v1583, %v1585
          %v1590 = vsel %vm1588, %v1585, %v1587
          %v1593 = vadd.f32 %v1560, %v1589
          %v1594 = vadd.f32 %v1561, %v1590
          %s1595 = sld [smem:[#allocation3 + $0x185]]
          %1596 = vrot.lane.b32.xlu0 %v1492, 53
          %v1597 = vpop.permute.xlu0 %1596
          %1598 = vrot.lane.b32.xlu0 %v1496, 53
          %v1599 = vpop.permute.xlu0 %1598
          %vm1600 = vcmask 433152
          %v1601 = vsel %vm1600, %v1597, %v1599
          %v1605 = vmul.f32 %v303, %v1597
          %v1606 = vmul.f32 %v299, %v1601
          %v1607 = vmul.f32 %v304, %v1599
          %v1608 = vstv %s1595
          %v1609 = vmul.f32 %v1608, %v1605
          %v1610 = vmul.f32 %v1608, %v1606
          %v1611 = vmul.f32 %v1608, %v1607
          %1615 = vrot.lane.b32.xlu0 %v1609, 75
          %v1616 = vpop.permute.xlu0 %1615
          %1617 = vrot.lane.b32.xlu0 %v1610, 75
          %v1618 = vpop.permute.xlu0 %1617
          %1619 = vrot.lane.b32.xlu0 %v1611, 75
          %v1620 = vpop.permute.xlu0 %1619
          %vm1621 = vcmask 613376
          %v1622 = vsel %vm1621, %v1616, %v1618
          %v1623 = vsel %vm1621, %v1618, %v1620
          %v1626 = vadd.f32 %v1593, %v1622
          %v1627 = vadd.f32 %v1594, %v1623
          %s1628 = sld [smem:[#allocation3 + $0x205]]
          %1629 = vrot.lane.b32.xlu0 %v1492, 69
          %v1630 = vpop.permute.xlu0 %1629
          %1631 = vrot.lane.b32.xlu0 %v1496, 69
          %v1632 = vpop.permute.xlu0 %1631
          %vm1633 = vcmask 564224
          %v1634 = vsel %vm1633, %v1630, %v1632
          %v1638 = vmul.f32 %v303, %v1630
          %v1639 = vmul.f32 %v299, %v1634
          %v1640 = vmul.f32 %v304, %v1632
          %v1641 = vstv %s1628
          %v1642 = vmul.f32 %v1641, %v1638
          %v1643 = vmul.f32 %v1641, %v1639
          %v1644 = vmul.f32 %v1641, %v1640
          %1648 = vrot.lane.b32.xlu0 %v1642, 59
          %v1649 = vpop.permute.xlu0 %1648
          %1650 = vrot.lane.b32.xlu0 %v1643, 59
          %v1651 = vpop.permute.xlu0 %1650
          %1652 = vrot.lane.b32.xlu0 %v1644, 59
          %v1653 = vpop.permute.xlu0 %1652
          %vm1654 = vcmask 482304
          %v1655 = vsel %vm1654, %v1649, %v1651
          %v1656 = vsel %vm1654, %v1651, %v1653
          %v1659 = vadd.f32 %v1626, %v1655
          %v1660 = vadd.f32 %v1627, %v1656
          %s1661 = sld [smem:[#allocation3 + $0x285]]
          %1662 = vrot.lane.b32.xlu0 %v1492, 85
          %v1663 = vpop.permute.xlu0 %1662
          %1664 = vrot.lane.b32.xlu0 %v1496, 85
          %v1665 = vpop.permute.xlu0 %1664
          %vm1666 = vcmask 695296
          %v1667 = vsel %vm1666, %v1663, %v1665
          %v1671 = vmul.f32 %v303, %v1663
          %v1672 = vmul.f32 %v299, %v1667
          %v1673 = vmul.f32 %v304, %v1665
          %v1674 = vstv %s1661
          %v1675 = vmul.f32 %v1674, %v1671
          %v1676 = vmul.f32 %v1674, %v1672
          %v1677 = vmul.f32 %v1674, %v1673
          %1681 = vrot.lane.b32.xlu0 %v1675, 43
          %v1682 = vpop.permute.xlu0 %1681
          %1683 = vrot.lane.b32.xlu0 %v1676, 43
          %v1684 = vpop.permute.xlu0 %1683
          %1685 = vrot.lane.b32.xlu0 %v1677, 43
          %v1686 = vpop.permute.xlu0 %1685
          %vm1687 = vcmask 351232
          %v1688 = vsel %vm1687, %v1682, %v1684
          %v1689 = vsel %vm1687, %v1684, %v1686
          %v1692 = vadd.f32 %v1659, %v1688
          %v1693 = vadd.f32 %v1660, %v1689
          %s1694 = sld [smem:[#allocation3 + $0x305]]
          %1695 = vrot.lane.b32.xlu0 %v1492, 101
          %v1696 = vpop.permute.xlu0 %1695
          %1697 = vrot.lane.b32.xlu0 %v1496, 101
          %v1698 = vpop.permute.xlu0 %1697
          %vm1699 = vcmask 826368
          %v1700 = vsel %vm1699, %v1696, %v1698
          %v1704 = vmul.f32 %v303, %v1696
          %v1705 = vmul.f32 %v299, %v1700
          %v1706 = vmul.f32 %v304, %v1698
          %v1707 = vstv %s1694
          %v1708 = vmul.f32 %v1707, %v1704
          %v1709 = vmul.f32 %v1707, %v1705
          %v1710 = vmul.f32 %v1707, %v1706
          %1714 = vrot.lane.b32.xlu0 %v1708, 27
          %v1715 = vpop.permute.xlu0 %1714
          %1716 = vrot.lane.b32.xlu0 %v1709, 27
          %v1717 = vpop.permute.xlu0 %1716
          %1718 = vrot.lane.b32.xlu0 %v1710, 27
          %v1719 = vpop.permute.xlu0 %1718
          %vm1720 = vcmask 220160
          %v1721 = vsel %vm1720, %v1715, %v1717
          %v1722 = vsel %vm1720, %v1717, %v1719
          %v1725 = vadd.f32 %v1692, %v1721
          %v1726 = vadd.f32 %v1693, %v1722
          %s1727 = scalar_lea.vmem [#allocation7], 6
          %v1728 = vld [vmem:[%s1727] ss:$8 sm:$0x3]
          %s1729 = sld [smem:[#allocation3 + $0x6]]
          %v1731 = vlaneseq
          %v1732 = vshrl.u32 %v1731, 7
          %v1733 = vsub.s32 0, %v1732
          %v1734 = vrot.slane %v1728, %v1733
          %v1735 = vlaneseq
          %v1736 = vshrl.u32 %v1735, 7
          %v1737 = vsub.s32 1, %v1736
          %v1738 = vrot.slane %v1728, %v1737
          %1739 = vrot.lane.b32.xlu0 %v1734, 6
          %v1740 = vpop.permute.xlu0 %1739
          %1741 = vrot.lane.b32.xlu0 %v1738, 6
          %v1742 = vpop.permute.xlu0 %1741
          %vm1743 = vcmask 48128
          %v1744 = vsel %vm1743, %v1740, %v1742
          %v1748 = vmul.f32 %v303, %v1740
          %v1749 = vmul.f32 %v299, %v1744
          %v1750 = vmul.f32 %v304, %v1742
          %v1751 = vstv %s1729
          %v1752 = vmul.f32 %v1751, %v1748
          %v1753 = vmul.f32 %v1751, %v1749
          %v1754 = vmul.f32 %v1751, %v1750
          %1758 = vrot.lane.b32.xlu0 %v1752, 122
          %v1759 = vpop.permute.xlu0 %1758
          %1760 = vrot.lane.b32.xlu0 %v1753, 122
          %v1761 = vpop.permute.xlu0 %1760
          %1762 = vrot.lane.b32.xlu0 %v1754, 122
          %v1763 = vpop.permute.xlu0 %1762
          %vm1764 = vcmask 998400
          %v1765 = vsel %vm1764, %v1759, %v1761
          %v1766 = vsel %vm1764, %v1761, %v1763
          %v1769 = vadd.f32 %v1725, %v1765
          %v1770 = vadd.f32 %v1726, %v1766
          %s1771 = sld [smem:[#allocation3 + $0x86]]
          %1772 = vrot.lane.b32.xlu0 %v1734, 22
          %v1773 = vpop.permute.xlu0 %1772
          %1774 = vrot.lane.b32.xlu0 %v1738, 22
          %v1775 = vpop.permute.xlu0 %1774
          %vm1776 = vcmask 179200
          %v1777 = vsel %vm1776, %v1773, %v1775
          %v1781 = vmul.f32 %v303, %v1773
          %v1782 = vmul.f32 %v299, %v1777
          %v1783 = vmul.f32 %v304, %v1775
          %v1784 = vstv %s1771
          %v1785 = vmul.f32 %v1784, %v1781
          %v1786 = vmul.f32 %v1784, %v1782
          %v1787 = vmul.f32 %v1784, %v1783
          %1791 = vrot.lane.b32.xlu0 %v1785, 106
          %v1792 = vpop.permute.xlu0 %1791
          %1793 = vrot.lane.b32.xlu0 %v1786, 106
          %v1794 = vpop.permute.xlu0 %1793
          %1795 = vrot.lane.b32.xlu0 %v1787, 106
          %v1796 = vpop.permute.xlu0 %1795
          %vm1797 = vcmask 867328
          %v1798 = vsel %vm1797, %v1792, %v1794
          %v1799 = vsel %vm1797, %v1794, %v1796
          %v1802 = vadd.f32 %v1769, %v1798
          %v1803 = vadd.f32 %v1770, %v1799
          %s1804 = sld [smem:[#allocation3 + $0x106]]
          %1805 = vrot.lane.b32.xlu0 %v1734, 38
          %v1806 = vpop.permute.xlu0 %1805
          %1807 = vrot.lane.b32.xlu0 %v1738, 38
          %v1808 = vpop.permute.xlu0 %1807
          %vm1809 = vcmask 310272
          %v1810 = vsel %vm1809, %v1806, %v1808
          %v1814 = vmul.f32 %v303, %v1806
          %v1815 = vmul.f32 %v299, %v1810
          %v1816 = vmul.f32 %v304, %v1808
          %v1817 = vstv %s1804
          %v1818 = vmul.f32 %v1817, %v1814
          %v1819 = vmul.f32 %v1817, %v1815
          %v1820 = vmul.f32 %v1817, %v1816
          %1824 = vrot.lane.b32.xlu0 %v1818, 90
          %v1825 = vpop.permute.xlu0 %1824
          %1826 = vrot.lane.b32.xlu0 %v1819, 90
          %v1827 = vpop.permute.xlu0 %1826
          %1828 = vrot.lane.b32.xlu0 %v1820, 90
          %v1829 = vpop.permute.xlu0 %1828
          %vm1830 = vcmask 736256
          %v1831 = vsel %vm1830, %v1825, %v1827
          %v1832 = vsel %vm1830, %v1827, %v1829
          %v1835 = vadd.f32 %v1802, %v1831
          %v1836 = vadd.f32 %v1803, %v1832
          %s1837 = sld [smem:[#allocation3 + $0x186]]
          %1838 = vrot.lane.b32.xlu0 %v1734, 54
          %v1839 = vpop.permute.xlu0 %1838
          %1840 = vrot.lane.b32.xlu0 %v1738, 54
          %v1841 = vpop.permute.xlu0 %1840
          %vm1842 = vcmask 441344
          %v1843 = vsel %vm1842, %v1839, %v1841
          %v1847 = vmul.f32 %v303, %v1839
          %v1848 = vmul.f32 %v299, %v1843
          %v1849 = vmul.f32 %v304, %v1841
          %v1850 = vstv %s1837
          %v1851 = vmul.f32 %v1850, %v1847
          %v1852 = vmul.f32 %v1850, %v1848
          %v1853 = vmul.f32 %v1850, %v1849
          %1857 = vrot.lane.b32.xlu0 %v1851, 74
          %v1858 = vpop.permute.xlu0 %1857
          %1859 = vrot.lane.b32.xlu0 %v1852, 74
          %v1860 = vpop.permute.xlu0 %1859
          %1861 = vrot.lane.b32.xlu0 %v1853, 74
          %v1862 = vpop.permute.xlu0 %1861
          %vm1863 = vcmask 605184
          %v1864 = vsel %vm1863, %v1858, %v1860
          %v1865 = vsel %vm1863, %v1860, %v1862
          %v1868 = vadd.f32 %v1835, %v1864
          %v1869 = vadd.f32 %v1836, %v1865
          %s1870 = sld [smem:[#allocation3 + $0x206]]
          %1871 = vrot.lane.b32.xlu0 %v1734, 70
          %v1872 = vpop.permute.xlu0 %1871
          %1873 = vrot.lane.b32.xlu0 %v1738, 70
          %v1874 = vpop.permute.xlu0 %1873
          %vm1875 = vcmask 572416
          %v1876 = vsel %vm1875, %v1872, %v1874
          %v1880 = vmul.f32 %v303, %v1872
          %v1881 = vmul.f32 %v299, %v1876
          %v1882 = vmul.f32 %v304, %v1874
          %v1883 = vstv %s1870
          %v1884 = vmul.f32 %v1883, %v1880
          %v1885 = vmul.f32 %v1883, %v1881
          %v1886 = vmul.f32 %v1883, %v1882
          %1890 = vrot.lane.b32.xlu0 %v1884, 58
          %v1891 = vpop.permute.xlu0 %1890
          %1892 = vrot.lane.b32.xlu0 %v1885, 58
          %v1893 = vpop.permute.xlu0 %1892
          %1894 = vrot.lane.b32.xlu0 %v1886, 58
          %v1895 = vpop.permute.xlu0 %1894
          %vm1896 = vcmask 474112
          %v1897 = vsel %vm1896, %v1891, %v1893
          %v1898 = vsel %vm1896, %v1893, %v1895
          %v1901 = vadd.f32 %v1868, %v1897
          %v1902 = vadd.f32 %v1869, %v1898
          %s1903 = sld [smem:[#allocation3 + $0x286]]
          %1904 = vrot.lane.b32.xlu0 %v1734, 86
          %v1905 = vpop.permute.xlu0 %1904
          %1906 = vrot.lane.b32.xlu0 %v1738, 86
          %v1907 = vpop.permute.xlu0 %1906
          %vm1908 = vcmask 703488
          %v1909 = vsel %vm1908, %v1905, %v1907
          %v1913 = vmul.f32 %v303, %v1905
          %v1914 = vmul.f32 %v299, %v1909
          %v1915 = vmul.f32 %v304, %v1907
          %v1916 = vstv %s1903
          %v1917 = vmul.f32 %v1916, %v1913
          %v1918 = vmul.f32 %v1916, %v1914
          %v1919 = vmul.f32 %v1916, %v1915
          %1923 = vrot.lane.b32.xlu0 %v1917, 42
          %v1924 = vpop.permute.xlu0 %1923
          %1925 = vrot.lane.b32.xlu0 %v1918, 42
          %v1926 = vpop.permute.xlu0 %1925
          %1927 = vrot.lane.b32.xlu0 %v1919, 42
          %v1928 = vpop.permute.xlu0 %1927
          %vm1929 = vcmask 343040
          %v1930 = vsel %vm1929, %v1924, %v1926
          %v1931 = vsel %vm1929, %v1926, %v1928
          %v1934 = vadd.f32 %v1901, %v1930
          %v1935 = vadd.f32 %v1902, %v1931
          %s1936 = sld [smem:[#allocation3 + $0x306]]
          %1937 = vrot.lane.b32.xlu0 %v1734, 102
          %v1938 = vpop.permute.xlu0 %1937
          %1939 = vrot.lane.b32.xlu0 %v1738, 102
          %v1940 = vpop.permute.xlu0 %1939
          %vm1941 = vcmask 834560
          %v1942 = vsel %vm1941, %v1938, %v1940
          %v1946 = vmul.f32 %v303, %v1938
          %v1947 = vmul.f32 %v299, %v1942
          %v1948 = vmul.f32 %v304, %v1940
          %v1949 = vstv %s1936
          %v1950 = vmul.f32 %v1949, %v1946
          %v1951 = vmul.f32 %v1949, %v1947
          %v1952 = vmul.f32 %v1949, %v1948
          %1956 = vrot.lane.b32.xlu0 %v1950, 26
          %v1957 = vpop.permute.xlu0 %1956
          %1958 = vrot.lane.b32.xlu0 %v1951, 26
          %v1959 = vpop.permute.xlu0 %1958
          %1960 = vrot.lane.b32.xlu0 %v1952, 26
          %v1961 = vpop.permute.xlu0 %1960
          %vm1962 = vcmask 211968
          %v1963 = vsel %vm1962, %v1957, %v1959
          %v1964 = vsel %vm1962, %v1959, %v1961
          %v1967 = vadd.f32 %v1934, %v1963
          %v1968 = vadd.f32 %v1935, %v1964
          %v1969 = vsub.f32 0.0, %v1967
          %v1970 = vsub.f32 0.0, %v1968
          %v1971 = vmul.f32 %v1969, 1.442695
          %v1972 = vpow.pop %v1971
          %v1973 = vmul.f32 %v1970, 1.442695
          %v1974 = vpow.pop %v1973
          %v1975 = vadd.f32 %v1972, 1.0
          %v1976 = vadd.f32 %v1974, 1.0
          %v1977 = vrcp.pop %v1975
          %v1978 = vrcp.pop %v1976
          %v1981 = vcombine.low %v1977, %v1978
          %v1983 = vunpack.c.l.s4 1966171168
          %v1984 = vunpack.c.0.s8 %v1983
          %v1985 = vlaneseq
          %v1986 = vshrl.u32 %v1985, 7
          %v1987 = vsub.s32 %v1984, %v1986
          %v1988 = vrot.slane %v1981, %v1987
          %v1990 = vunpack.c.l.s4 1966171168
          %v1991 = vunpack.c.0.s8 %v1990
          %v1992 = vlaneseq
          %v1993 = vshrl.u32 %v1992, 7
          %v1994 = vsub.s32 %v1991, %v1993
          %v1995 = vrot.slane %v1988, %v1994
          %1997 = vst.msk [vmem:[%s227] sm:$0x3] %vm279, %v1995
        $region52: #{tpu_custom_call.1} parent=31 // pred_fallthru
          _
        %s1998 = sand.u32 %s112, 1
        %s1999 = scalar_lea.sflag [#allocation5], %s1998
        %s2000 = sand.u32 %s112, 1
        %s2001 = smul.addr %s2000, 2
        %s2002 = scalar_lea.vmem [#allocation10], %s2001
        // Predicated region
        $region53: #{tpu_custom_call.1} parent=31 // pred_check
          %p2003 = pneg %p122
        $region54: #{tpu_custom_call.1} parent=31 // pred_check_branch
          %2005 = sbr.rel (%p2003) target = $region56
        $region55: #{tpu_custom_call.1} parent=31 // pred_region
          %s2007 = ssub.s32 32, 32
          %2008 = vsyncadd %s1999, %s2007
          %s2009 = smul.addr %s26, 2
          %s2010 = smul.addr %s2009, 16
          %s2011 = scalar_lea.hbm %s3, %s2010
          %s2013 = sshll.u32 %s2002, 4
          %s2014 = int_to_ptr.vmem [resolvable:$true] %s2013
          %2016 = dma.vmem_to_hbm [thread:$0]  %s2014, 32, %s2011, %s1999
        $region56: #{tpu_custom_call.1} parent=31 // pred_fallthru
          _
      $region32: #{tpu_custom_call.1} parent=5 // pred_fallthru
        _
      %p2017 = scmp.le.s32.totalorder 2, %s17
      // Predicated region
      $region57: #{tpu_custom_call.1} parent=5 // pred_check
        %p2018 = pneg %p2017
      $region58: #{tpu_custom_call.1} parent=5 // pred_check_branch
        %2020 = sbr.rel (%p2018) target = $region60
      $region59: #{tpu_custom_call.1} parent=5 // pred_region
        %s2021 = ssub.s32 %s17, 2
        // Predicated region
        $region61: #{tpu_custom_call.1} parent=59 // pred_check
          %p2022 = pneg %p128
        $region62: #{tpu_custom_call.1} parent=59 // pred_check_branch
          %2024 = sbr.rel (%p2022) target = $region64
        $region63: #{tpu_custom_call.1} parent=59 // pred_region
          %s2025 = sand.u32 %s113, 1
          %s2026 = scalar_lea.sflag [#allocation5], %s2025
          %s2027 = sand.u32 %s113, 1
          %s2028 = smul.addr %s2027, 2
          %s2029 = scalar_lea.vmem [#allocation10], %s2028
          %2030 = dma.done %s2026, 32
        $region64: #{tpu_custom_call.1} parent=59 // pred_fallthru
          _
      $region60: #{tpu_custom_call.1} parent=5 // pred_fallthru
        _
    $region6: #{tpu_custom_call.1} parent=1 // loop_footer
      %s21 = sadd.s32 1, %s17
    $region7: #{tpu_custom_call.1} parent=1 // loop_footer_branch
      %16 = sbr.rel target = $region3
    $region8: #{tpu_custom_call.1} parent=1 // loop_exit
      _
    %2031 = vsyncpa [#allocation4], 1
    %s2032 = scalar_lea.sflag [#allocation4], 1
    %2033 = vsyncpa %s2032, 1
    %2034 = vsyncpa [#allocation9], 1
    %s2035 = scalar_lea.sflag [#allocation9], 1
    %2036 = vsyncpa %s2035, 1
    %2037 = vsyncpa [#allocation5], 1
    %s2038 = scalar_lea.sflag [#allocation5], 1
    %2039 = vsyncpa %s2038, 1
    %2040 = vsyncpa [#allocation6], 1
    %s2041 = scalar_lea.sflag [#allocation6], 1
    %2042 = vsyncpa %s2041, 1

</llo_original>
